<compile_context>
chip_gen: v7x
topology: tpu7x:2x2x1
jax: 0.10.0
libtpu: 0.0.40
codegen_flags: <defaults>
</compile_context>

<pallas_src>
import jax
import jax.numpy as jnp
import numpy as np
from jax.experimental import pallas as pl
from jax.experimental.pallas import tpu as pltpu

COMPONENT_WEIGHT = 0.95
NUM_FG_CLASSES = 3          # PyTorch loop `for j in range(1, 4)`
LANES = 128
SUBLANES = 8
MOMS_PER_DIST = 3           # N, sum(pix^2), sum(pix^4)
NUM_DISTS = 2 * NUM_FG_CLASSES
NUM_MOMS = NUM_DISTS * MOMS_PER_DIST  # 18


def _fold_to_sublanes(x):
    """(ts, 128) -> (8, 128) partial sums via cheap leading-axis VPU adds.

    The cross-lane (XLU) reduce is deferred to the once-per-batch finalize step.
    """
    return jnp.sum(x.reshape(-1, SUBLANES, LANES), axis=0)


def _gamma_fit(n, s2, s4):
    """Moments -> (shape, scale), reproducing the PyTorch early-return
    (sum(target)==0) and zero-denominator branches exactly via jnp.where."""
    safe_n = jnp.where(n == 0.0, 1.0, n)
    e_x2 = s2 / safe_n
    e_x4 = s4 / safe_n
    denom = e_x4 - e_x2 * e_x2
    safe_denom = jnp.where(denom == 0.0, 1.0, denom)
    shape = jnp.where((n == 0.0) | (denom == 0.0), 0.0, (e_x2 * e_x2) / safe_denom)
    scale = jnp.where(n == 0.0, 0.0, e_x2)
    return shape, scale


def _make_kernel(component_weight):
    cw = float(component_weight)

    def speckle_loss_kernel(img_ref, tgt_ref, out_ref, loss_ref, mom_ref):
        # img_ref:  (1, ts, 128)    f32
        # tgt_ref:  (1, ts, 128)    i32 label map (0..3, 0 also used for padding)
        # out_ref:  (1, 3, ts, 128) f32 foreground channels 1..3 of the net output
        # loss_ref: (1, 8, 128)     f32 per-batch loss block (written once per batch)
        # mom_ref:  (18, 8, 128)    f32 VMEM moment-partial accumulators
        t = pl.program_id(1)

        @pl.when(t == 0)
        def _init():
            mom_ref[...] = jnp.zeros_like(mom_ref)

        img = img_ref[0]                 # (ts, 128)
        tgt = tgt_ref[0]                 # (ts, 128) int32
        img2 = img * img                 # hoisted, shared by all 6 distributions
        img4 = img2 * img2

        for j in range(NUM_FG_CLASSES):  # static unroll over 3 classes
            base = 2 * MOMS_PER_DIST * j
            # ---- target-mask distribution (mask^2 == mask: skip pix = mask*img) ----
            mask = (tgt == (j + 1)).astype(jnp.float32)
            mom_ref[base + 0] += _fold_to_sublanes(mask)
            mom_ref[base + 1] += _fold_to_sublanes(mask * img2)
            mom_ref[base + 2] += _fold_to_sublanes(mask * img4)
            # ---- network-output-channel distribution ----
            w = out_ref[0, j]            # (ts, 128), single channel, no full-block load
            w2 = w * w
            mom_ref[base + 3] += _fold_to_sublanes(w)
            mom_ref[base + 4] += _fold_to_sublanes(w2 * img2)
            mom_ref[base + 5] += _fold_to_sublanes((w2 * w2) * img4)

        @pl.when(t == pl.num_programs(1) - 1)
        def _finalize():
            acc = jnp.float32(0.0)
            for j in range(NUM_FG_CLASSES):
                base = 2 * MOMS_PER_DIST * j
                t_shape, t_scale = _gamma_fit(jnp.sum(mom_ref[base + 0]),
                                              jnp.sum(mom_ref[base + 1]),
                                              jnp.sum(mom_ref[base + 2]))
                o_shape, o_scale = _gamma_fit(jnp.sum(mom_ref[base + 3]),
                                              jnp.sum(mom_ref[base + 4]),
                                              jnp.sum(mom_ref[base + 5]))
                acc += (cw * (t_shape - o_shape) ** 2
                        + (1.0 - cw) * (t_scale - o_scale) ** 2)
            loss_ref[...] = jnp.full(loss_ref.shape, acc, dtype=loss_ref.dtype)

    return speckle_loss_kernel


def heavyside_approx(x, coef=1.0, shift=0.0):
    return 1.0 / (1.0 + jnp.exp(-coef * (x - shift)))


def speckle_loss(outputs, targets, imgs, apply_nonlin=False,
                 component_weight=COMPONENT_WEIGHT, sublane_tile=512):
    """JAX/Pallas equivalent of SpeckleLoss.forward (apply_nonlin=None by default)."""
    outputs = outputs.astype(jnp.float32)
    imgs = imgs.astype(jnp.float32)
    targets = targets.astype(jnp.int32)
    B, C, H, W = outputs.shape
    assert C >= NUM_FG_CLASSES + 1

    if apply_nonlin:
        # optional nonlinearity path (softmax over channels + heavyside) in plain JAX
        # TODO(synk): fuse softmax + heavyside into the kernel to avoid the extra HBM pass.
        outputs = jax.nn.softmax(outputs, axis=1)
        outputs = heavyside_approx(outputs, coef=10.0, shift=0.5)

    # Only channels j = 1..3 are ever read -> never DMA channel 0 / extras.
    out_fg = outputs[:, 1:NUM_FG_CLASSES + 1]                   # (B, 3, H, W)

    # Lane-dense spatial flattening + zero padding (padding contributes nothing:
    # mask == 0 there for padded label 0, output weights padded with 0).
    hw = H * W
    s_raw = -(-hw // LANES)                                     # ceil(hw / 128)
    ts = min(int(sublane_tile), -(-s_raw // SUBLANES) * SUBLANES)
    s_pad = -(-s_raw // ts) * ts
    hw_pad = s_pad * LANES
    n_tiles = s_pad // ts

    def flat_pad(x, fill):
        x = x.reshape(x.shape[:-2] + (hw,))
        pad = [(0, 0)] * (x.ndim - 1) + [(0, hw_pad - hw)]
        x = jnp.pad(x, pad, constant_values=fill)
        return x.reshape(x.shape[:-1] + (s_pad, LANES))

    img_f = flat_pad(imgs, 0.0)      # (B, s_pad, 128) f32
    tgt_f = flat_pad(targets, 0)     # (B, s_pad, 128) i32
    out_f = flat_pad(out_fg, 0.0)    # (B, 3, s_pad, 128) f32

    losses = pl.pallas_call(
        _make_kernel(component_weight),
        out_shape=jax.ShapeDtypeStruct((B, SUBLANES, LANES), jnp.float32),
        grid_spec=pltpu.PrefetchScalarGridSpec(
            num_scalar_prefetch=0,
            grid=(B, n_tiles),
            in_specs=[
                pl.BlockSpec((1, ts, LANES), lambda b, t: (b, t, 0)),
                pl.BlockSpec((1, ts, LANES), lambda b, t: (b, t, 0)),
                pl.BlockSpec((1, NUM_FG_CLASSES, ts, LANES),
                             lambda b, t: (b, 0, t, 0)),
            ],
            out_specs=pl.BlockSpec((1, SUBLANES, LANES), lambda b, t: (b, 0, 0)),
            scratch_shapes=[pltpu.VMEM((NUM_MOMS, SUBLANES, LANES), jnp.float32)],
        ),
        compiler_params=pltpu.CompilerParams(
            dimension_semantics=("parallel", "arbitrary")),
    )(img_f, tgt_f, out_f)

    # per-batch losses (block is filled with the scalar) -> total loss
    return jnp.sum(losses[:, 0, 0])


def speckle_loss_ref(outputs, targets, imgs, component_weight=COMPONENT_WEIGHT):
    """Pure-JAX reference mirroring the PyTorch forward (apply_nonlin=None)."""
    def dist(w, img):
        N = jnp.sum(w)
        pix = w * img
        pix2 = pix * pix
        pix4 = pix2 * pix2
        safe_n = jnp.where(N == 0.0, 1.0, N)
        e_x2 = jnp.sum(pix2) / safe_n
        e_x4 = jnp.sum(pix4) / safe_n
        denom = e_x4 - e_x2 ** 2
        shape = jnp.where(denom == 0.0, 0.0,
                          e_x2 ** 2 / jnp.where(denom == 0.0, 1.0, denom))
        shape = jnp.where(N == 0.0, 0.0, shape)
        scale = jnp.where(N == 0.0, 0.0, e_x2)
        return shape, scale

    loss = jnp.float32(0.0)
    for i in range(imgs.shape[0]):
        img = imgs[i].astype(jnp.float32)
        out = outputs[i].astype(jnp.float32)
        tgt = targets[i]
        for j in range(1, NUM_FG_CLASSES + 1):
            mask = (tgt == j).astype(jnp.float32)
            ts_, tc = dist(mask, img)
            os_, oc = dist(out[j], img)
            loss += component_weight * (ts_ - os_) ** 2 + (1 - component_weight) * (tc - oc) ** 2
    return loss


if __name__ == "__main__":
    key = jax.random.PRNGKey(0)
    k1, k2, k3 = jax.random.split(key, 3)

    B, C, H, W = 2, 4, 16, 16
    imgs = jax.random.normal(k1, (B, H, W), dtype=jnp.float32)
    targets = jax.random.randint(k2, (B, H, W), 0, 4, dtype=jnp.int32)
    outputs = jax.random.uniform(k3, (B, C, H, W), dtype=jnp.float32)

    loss = jax.block_until_ready(speckle_loss(outputs, targets, imgs))
    ref = jax.block_until_ready(speckle_loss_ref(outputs, targets, imgs))
    np.testing.assert_allclose(np.asarray(loss), np.asarray(ref), rtol=1e-4, atol=1e-5)

    # exercise the "class absent" (sum(target) == 0) early-return branch
    targets2 = jnp.where(targets == 3, 0, targets)
    loss2 = jax.block_until_ready(speckle_loss(outputs, targets2, imgs))
    ref2 = jax.block_until_ready(speckle_loss_ref(outputs, targets2, imgs))
    np.testing.assert_allclose(np.asarray(loss2), np.asarray(ref2), rtol=1e-4, atol=1e-5)

    print("KERNEL_OK")
</pallas_src>

<mosaic_0001>
module attributes {stable_mosaic.version = 11 : i64} {
  func.func @speckle_loss_kernel(%arg0: i32, %arg1: i32, %arg2: memref<1x8x128xf32, #tpu.memory_space<vmem>>, %arg3: memref<1x8x128xi32, #tpu.memory_space<vmem>>, %arg4: memref<1x3x8x128xf32, #tpu.memory_space<vmem>>, %arg5: memref<1x8x128xf32, #tpu.memory_space<vmem>>, %arg6: memref<18x8x128xf32, #tpu.memory_space<vmem>>) attributes {dimension_semantics = [#tpu.dimension_semantics<parallel>, #tpu.dimension_semantics<arbitrary>], iteration_bounds = array<i64: 2, 1>, scalar_prefetch = 0 : i64, scratch_operands = 1 : i64, tpu.core_type = #tpu.core_type<tc>, window_params = [{transform_indices = @transform_0, window_bounds = array<i64: 1, 8, 128>}, {transform_indices = @transform_1, window_bounds = array<i64: 1, 8, 128>}, {transform_indices = @transform_2, window_bounds = array<i64: 1, 3, 8, 128>}, {transform_indices = @transform_3, window_bounds = array<i64: 1, 8, 128>}]} {
    %c0_i32 = arith.constant 0 : i32
    %0 = arith.cmpi eq, %arg1, %c0_i32 : i32
    %1 = arith.extui %0 : i1 to i32
    %c0_i32_0 = arith.constant 0 : i32
    %2 = arith.cmpi ne, %1, %c0_i32_0 : i32
    scf.if %2 {
      %cst_128 = arith.constant 0.000000e+00 : f32
      %192 = vector.broadcast %cst_128 : f32 to vector<18x8x128xf32>
      %c0_129 = arith.constant 0 : index
      %c0_130 = arith.constant 0 : index
      %c0_131 = arith.constant 0 : index
      %193 = vector.load %arg6[%c0_129, %c0_130, %c0_131] : memref<18x8x128xf32, #tpu.memory_space<vmem>>, vector<18x8x128xf32>
      tpu.vector_store %arg6[%c0_129, %c0_130, %c0_131], %192 {strides = array<i32>} : memref<18x8x128xf32, #tpu.memory_space<vmem>>, vector<18x8x128xf32>,
    } else {
    }
    %c0 = arith.constant 0 : index
    %c0_1 = arith.constant 0 : index
    %c0_2 = arith.constant 0 : index
    %3 = vector.load %arg2[%c0, %c0_1, %c0_2] : memref<1x8x128xf32, #tpu.memory_space<vmem>>, vector<1x8x128xf32>
    %4 = vector.shape_cast %3 : vector<1x8x128xf32> to vector<8x128xf32>
    %c0_3 = arith.constant 0 : index
    %c0_4 = arith.constant 0 : index
    %c0_5 = arith.constant 0 : index
    %5 = vector.load %arg3[%c0_3, %c0_4, %c0_5] : memref<1x8x128xi32, #tpu.memory_space<vmem>>, vector<1x8x128xi32>
    %6 = vector.shape_cast %5 : vector<1x8x128xi32> to vector<8x128xi32>
    %7 = arith.mulf %4, %4 : vector<8x128xf32>
    %8 = arith.mulf %7, %7 : vector<8x128xf32>
    %c1_i32 = arith.constant 1 : i32
    %9 = vector.broadcast %c1_i32 : i32 to vector<8x128xi32>
    %10 = arith.cmpi eq, %6, %9 : vector<8x128xi32>
    %11 = arith.extui %10 : vector<8x128xi1> to vector<8x128xi32>
    %12 = arith.sitofp %11 : vector<8x128xi32> to vector<8x128xf32>
    %c0_6 = arith.constant 0 : index
    %c0_7 = arith.constant 0 : index
    %c0_8 = arith.constant 0 : index
    %13 = vector.load %arg6[%c0_6, %c0_7, %c0_8] : memref<18x8x128xf32, #tpu.memory_space<vmem>>, vector<1x8x128xf32>
    %14 = vector.shape_cast %13 : vector<1x8x128xf32> to vector<8x128xf32>
    %15 = vector.shape_cast %12 : vector<8x128xf32> to vector<1x8x128xf32>
    %cst = arith.constant dense<0.000000e+00> : vector<8x128xf32>
    %16 = vector.multi_reduction <add>, %15, %cst [0] : vector<1x8x128xf32> to vector<8x128xf32>
    %17 = arith.addf %14, %16 : vector<8x128xf32>
    %c0_9 = arith.constant 0 : index
    %c0_10 = arith.constant 0 : index
    %c0_11 = arith.constant 0 : index
    %18 = vector.load %arg6[%c0_9, %c0_10, %c0_11] : memref<18x8x128xf32, #tpu.memory_space<vmem>>, vector<1x8x128xf32>
    %19 = vector.shape_cast %18 : vector<1x8x128xf32> to vector<8x128xf32>
    %20 = vector.shape_cast %17 : vector<8x128xf32> to vector<1x8x128xf32>
    tpu.vector_store %arg6[%c0_9, %c0_10, %c0_11], %20 {strides = array<i32>} : memref<18x8x128xf32, #tpu.memory_space<vmem>>, vector<1x8x128xf32>,
    %c1 = arith.constant 1 : index
    %c0_12 = arith.constant 0 : index
    %c0_13 = arith.constant 0 : index
    %21 = vector.load %arg6[%c1, %c0_12, %c0_13] : memref<18x8x128xf32, #tpu.memory_space<vmem>>, vector<1x8x128xf32>
    %22 = vector.shape_cast %21 : vector<1x8x128xf32> to vector<8x128xf32>
    %23 = arith.mulf %12, %7 : vector<8x128xf32>
    %24 = vector.shape_cast %23 : vector<8x128xf32> to vector<1x8x128xf32>
    %cst_14 = arith.constant dense<0.000000e+00> : vector<8x128xf32>
    %25 = vector.multi_reduction <add>, %24, %cst_14 [0] : vector<1x8x128xf32> to vector<8x128xf32>
    %26 = arith.addf %22, %25 : vector<8x128xf32>
    %c1_15 = arith.constant 1 : index
    %c0_16 = arith.constant 0 : index
    %c0_17 = arith.constant 0 : index
    %27 = vector.load %arg6[%c1_15, %c0_16, %c0_17] : memref<18x8x128xf32, #tpu.memory_space<vmem>>, vector<1x8x128xf32>
    %28 = vector.shape_cast %27 : vector<1x8x128xf32> to vector<8x128xf32>
    %29 = vector.shape_cast %26 : vector<8x128xf32> to vector<1x8x128xf32>
    tpu.vector_store %arg6[%c1_15, %c0_16, %c0_17], %29 {strides = array<i32>} : memref<18x8x128xf32, #tpu.memory_space<vmem>>, vector<1x8x128xf32>,
    %c2 = arith.constant 2 : index
    %c0_18 = arith.constant 0 : index
    %c0_19 = arith.constant 0 : index
    %30 = vector.load %arg6[%c2, %c0_18, %c0_19] : memref<18x8x128xf32, #tpu.memory_space<vmem>>, vector<1x8x128xf32>
    %31 = vector.shape_cast %30 : vector<1x8x128xf32> to vector<8x128xf32>
    %32 = arith.mulf %12, %8 : vector<8x128xf32>
    %33 = vector.shape_cast %32 : vector<8x128xf32> to vector<1x8x128xf32>
    %cst_20 = arith.constant dense<0.000000e+00> : vector<8x128xf32>
    %34 = vector.multi_reduction <add>, %33, %cst_20 [0] : vector<1x8x128xf32> to vector<8x128xf32>
    %35 = arith.addf %31, %34 : vector<8x128xf32>
    %c2_21 = arith.constant 2 : index
    %c0_22 = arith.constant 0 : index
    %c0_23 = arith.constant 0 : index
    %36 = vector.load %arg6[%c2_21, %c0_22, %c0_23] : memref<18x8x128xf32, #tpu.memory_space<vmem>>, vector<1x8x128xf32>
    %37 = vector.shape_cast %36 : vector<1x8x128xf32> to vector<8x128xf32>
    %38 = vector.shape_cast %35 : vector<8x128xf32> to vector<1x8x128xf32>
    tpu.vector_store %arg6[%c2_21, %c0_22, %c0_23], %38 {strides = array<i32>} : memref<18x8x128xf32, #tpu.memory_space<vmem>>, vector<1x8x128xf32>,
    %c0_24 = arith.constant 0 : index
    %c0_25 = arith.constant 0 : index
    %c0_26 = arith.constant 0 : index
    %c0_27 = arith.constant 0 : index
    %39 = vector.load %arg4[%c0_24, %c0_25, %c0_26, %c0_27] : memref<1x3x8x128xf32, #tpu.memory_space<vmem>>, vector<1x1x8x128xf32>
    %40 = vector.shape_cast %39 : vector<1x1x8x128xf32> to vector<8x128xf32>
    %41 = arith.mulf %40, %40 : vector<8x128xf32>
    %c3 = arith.constant 3 : index
    %c0_28 = arith.constant 0 : index
    %c0_29 = arith.constant 0 : index
    %42 = vector.load %arg6[%c3, %c0_28, %c0_29] : memref<18x8x128xf32, #tpu.memory_space<vmem>>, vector<1x8x128xf32>
    %43 = vector.shape_cast %42 : vector<1x8x128xf32> to vector<8x128xf32>
    %44 = vector.shape_cast %40 : vector<8x128xf32> to vector<1x8x128xf32>
    %cst_30 = arith.constant dense<0.000000e+00> : vector<8x128xf32>
    %45 = vector.multi_reduction <add>, %44, %cst_30 [0] : vector<1x8x128xf32> to vector<8x128xf32>
    %46 = arith.addf %43, %45 : vector<8x128xf32>
    %c3_31 = arith.constant 3 : index
    %c0_32 = arith.constant 0 : index
    %c0_33 = arith.constant 0 : index
    %47 = vector.load %arg6[%c3_31, %c0_32, %c0_33] : memref<18x8x128xf32, #tpu.memory_space<vmem>>, vector<1x8x128xf32>
    %48 = vector.shape_cast %47 : vector<1x8x128xf32> to vector<8x128xf32>
    %49 = vector.shape_cast %46 : vector<8x128xf32> to vector<1x8x128xf32>
    tpu.vector_store %arg6[%c3_31, %c0_32, %c0_33], %49 {strides = array<i32>} : memref<18x8x128xf32, #tpu.memory_space<vmem>>, vector<1x8x128xf32>,
    %c4 = arith.constant 4 : index
    %c0_34 = arith.constant 0 : index
    %c0_35 = arith.constant 0 : index
    %50 = vector.load %arg6[%c4, %c0_34, %c0_35] : memref<18x8x128xf32, #tpu.memory_space<vmem>>, vector<1x8x128xf32>
    %51 = vector.shape_cast %50 : vector<1x8x128xf32> to vector<8x128xf32>
    %52 = arith.mulf %41, %7 : vector<8x128xf32>
    %53 = vector.shape_cast %52 : vector<8x128xf32> to vector<1x8x128xf32>
    %cst_36 = arith.constant dense<0.000000e+00> : vector<8x128xf32>
    %54 = vector.multi_reduction <add>, %53, %cst_36 [0] : vector<1x8x128xf32> to vector<8x128xf32>
    %55 = arith.addf %51, %54 : vector<8x128xf32>
    %c4_37 = arith.constant 4 : index
    %c0_38 = arith.constant 0 : index
    %c0_39 = arith.constant 0 : index
    %56 = vector.load %arg6[%c4_37, %c0_38, %c0_39] : memref<18x8x128xf32, #tpu.memory_space<vmem>>, vector<1x8x128xf32>
    %57 = vector.shape_cast %56 : vector<1x8x128xf32> to vector<8x128xf32>
    %58 = vector.shape_cast %55 : vector<8x128xf32> to vector<1x8x128xf32>
    tpu.vector_store %arg6[%c4_37, %c0_38, %c0_39], %58 {strides = array<i32>} : memref<18x8x128xf32, #tpu.memory_space<vmem>>, vector<1x8x128xf32>,
    %c5 = arith.constant 5 : index
    %c0_40 = arith.constant 0 : index
    %c0_41 = arith.constant 0 : index
    %59 = vector.load %arg6[%c5, %c0_40, %c0_41] : memref<18x8x128xf32, #tpu.memory_space<vmem>>, vector<1x8x128xf32>
    %60 = vector.shape_cast %59 : vector<1x8x128xf32> to vector<8x128xf32>
    %61 = arith.mulf %41, %41 : vector<8x128xf32>
    %62 = arith.mulf %61, %8 : vector<8x128xf32>
    %63 = vector.shape_cast %62 : vector<8x128xf32> to vector<1x8x128xf32>
    %cst_42 = arith.constant dense<0.000000e+00> : vector<8x128xf32>
    %64 = vector.multi_reduction <add>, %63, %cst_42 [0] : vector<1x8x128xf32> to vector<8x128xf32>
    %65 = arith.addf %60, %64 : vector<8x128xf32>
    %c5_43 = arith.constant 5 : index
    %c0_44 = arith.constant 0 : index
    %c0_45 = arith.constant 0 : index
    %66 = vector.load %arg6[%c5_43, %c0_44, %c0_45] : memref<18x8x128xf32, #tpu.memory_space<vmem>>, vector<1x8x128xf32>
    %67 = vector.shape_cast %66 : vector<1x8x128xf32> to vector<8x128xf32>
    %68 = vector.shape_cast %65 : vector<8x128xf32> to vector<1x8x128xf32>
    tpu.vector_store %arg6[%c5_43, %c0_44, %c0_45], %68 {strides = array<i32>} : memref<18x8x128xf32, #tpu.memory_space<vmem>>, vector<1x8x128xf32>,
    %c2_i32 = arith.constant 2 : i32
    %69 = vector.broadcast %c2_i32 : i32 to vector<8x128xi32>
    %70 = arith.cmpi eq, %6, %69 : vector<8x128xi32>
    %71 = arith.extui %70 : vector<8x128xi1> to vector<8x128xi32>
    %72 = arith.sitofp %71 : vector<8x128xi32> to vector<8x128xf32>
    %c6 = arith.constant 6 : index
    %c0_46 = arith.constant 0 : index
    %c0_47 = arith.constant 0 : index
    %73 = vector.load %arg6[%c6, %c0_46, %c0_47] : memref<18x8x128xf32, #tpu.memory_space<vmem>>, vector<1x8x128xf32>
    %74 = vector.shape_cast %73 : vector<1x8x128xf32> to vector<8x128xf32>
    %75 = vector.shape_cast %72 : vector<8x128xf32> to vector<1x8x128xf32>
    %cst_48 = arith.constant dense<0.000000e+00> : vector<8x128xf32>
    %76 = vector.multi_reduction <add>, %75, %cst_48 [0] : vector<1x8x128xf32> to vector<8x128xf32>
    %77 = arith.addf %74, %76 : vector<8x128xf32>
    %c6_49 = arith.constant 6 : index
    %c0_50 = arith.constant 0 : index
    %c0_51 = arith.constant 0 : index
    %78 = vector.load %arg6[%c6_49, %c0_50, %c0_51] : memref<18x8x128xf32, #tpu.memory_space<vmem>>, vector<1x8x128xf32>
    %79 = vector.shape_cast %78 : vector<1x8x128xf32> to vector<8x128xf32>
    %80 = vector.shape_cast %77 : vector<8x128xf32> to vector<1x8x128xf32>
    tpu.vector_store %arg6[%c6_49, %c0_50, %c0_51], %80 {strides = array<i32>} : memref<18x8x128xf32, #tpu.memory_space<vmem>>, vector<1x8x128xf32>,
    %c7 = arith.constant 7 : index
    %c0_52 = arith.constant 0 : index
    %c0_53 = arith.constant 0 : index
    %81 = vector.load %arg6[%c7, %c0_52, %c0_53] : memref<18x8x128xf32, #tpu.memory_space<vmem>>, vector<1x8x128xf32>
    %82 = vector.shape_cast %81 : vector<1x8x128xf32> to vector<8x128xf32>
    %83 = arith.mulf %72, %7 : vector<8x128xf32>
    %84 = vector.shape_cast %83 : vector<8x128xf32> to vector<1x8x128xf32>
    %cst_54 = arith.constant dense<0.000000e+00> : vector<8x128xf32>
    %85 = vector.multi_reduction <add>, %84, %cst_54 [0] : vector<1x8x128xf32> to vector<8x128xf32>
    %86 = arith.addf %82, %85 : vector<8x128xf32>
    %c7_55 = arith.constant 7 : index
    %c0_56 = arith.constant 0 : index
    %c0_57 = arith.constant 0 : index
    %87 = vector.load %arg6[%c7_55, %c0_56, %c0_57] : memref<18x8x128xf32, #tpu.memory_space<vmem>>, vector<1x8x128xf32>
    %88 = vector.shape_cast %87 : vector<1x8x128xf32> to vector<8x128xf32>
    %89 = vector.shape_cast %86 : vector<8x128xf32> to vector<1x8x128xf32>
    tpu.vector_store %arg6[%c7_55, %c0_56, %c0_57], %89 {strides = array<i32>} : memref<18x8x128xf32, #tpu.memory_space<vmem>>, vector<1x8x128xf32>,
    %c8 = arith.constant 8 : index
    %c0_58 = arith.constant 0 : index
    %c0_59 = arith.constant 0 : index
    %90 = vector.load %arg6[%c8, %c0_58, %c0_59] : memref<18x8x128xf32, #tpu.memory_space<vmem>>, vector<1x8x128xf32>
    %91 = vector.shape_cast %90 : vector<1x8x128xf32> to vector<8x128xf32>
    %92 = arith.mulf %72, %8 : vector<8x128xf32>
    %93 = vector.shape_cast %92 : vector<8x128xf32> to vector<1x8x128xf32>
    %cst_60 = arith.constant dense<0.000000e+00> : vector<8x128xf32>
    %94 = vector.multi_reduction <add>, %93, %cst_60 [0] : vector<1x8x128xf32> to vector<8x128xf32>
    %95 = arith.addf %91, %94 : vector<8x128xf32>
    %c8_61 = arith.constant 8 : index
    %c0_62 = arith.constant 0 : index
    %c0_63 = arith.constant 0 : index
    %96 = vector.load %arg6[%c8_61, %c0_62, %c0_63] : memref<18x8x128xf32, #tpu.memory_space<vmem>>, vector<1x8x128xf32>
    %97 = vector.shape_cast %96 : vector<1x8x128xf32> to vector<8x128xf32>
    %98 = vector.shape_cast %95 : vector<8x128xf32> to vector<1x8x128xf32>
    tpu.vector_store %arg6[%c8_61, %c0_62, %c0_63], %98 {strides = array<i32>} : memref<18x8x128xf32, #tpu.memory_space<vmem>>, vector<1x8x128xf32>,
    %c0_64 = arith.constant 0 : index
    %c1_65 = arith.constant 1 : index
    %c0_66 = arith.constant 0 : index
    %c0_67 = arith.constant 0 : index
    %99 = vector.load %arg4[%c0_64, %c1_65, %c0_66, %c0_67] : memref<1x3x8x128xf32, #tpu.memory_space<vmem>>, vector<1x1x8x128xf32>
    %100 = vector.shape_cast %99 : vector<1x1x8x128xf32> to vector<8x128xf32>
    %101 = arith.mulf %100, %100 : vector<8x128xf32>
    %c9 = arith.constant 9 : index
    %c0_68 = arith.constant 0 : index
    %c0_69 = arith.constant 0 : index
    %102 = vector.load %arg6[%c9, %c0_68, %c0_69] : memref<18x8x128xf32, #tpu.memory_space<vmem>>, vector<1x8x128xf32>
    %103 = vector.shape_cast %102 : vector<1x8x128xf32> to vector<8x128xf32>
    %104 = vector.shape_cast %100 : vector<8x128xf32> to vector<1x8x128xf32>
    %cst_70 = arith.constant dense<0.000000e+00> : vector<8x128xf32>
    %105 = vector.multi_reduction <add>, %104, %cst_70 [0] : vector<1x8x128xf32> to vector<8x128xf32>
    %106 = arith.addf %103, %105 : vector<8x128xf32>
    %c9_71 = arith.constant 9 : index
    %c0_72 = arith.constant 0 : index
    %c0_73 = arith.constant 0 : index
    %107 = vector.load %arg6[%c9_71, %c0_72, %c0_73] : memref<18x8x128xf32, #tpu.memory_space<vmem>>, vector<1x8x128xf32>
    %108 = vector.shape_cast %107 : vector<1x8x128xf32> to vector<8x128xf32>
    %109 = vector.shape_cast %106 : vector<8x128xf32> to vector<1x8x128xf32>
    tpu.vector_store %arg6[%c9_71, %c0_72, %c0_73], %109 {strides = array<i32>} : memref<18x8x128xf32, #tpu.memory_space<vmem>>, vector<1x8x128xf32>,
    %c10 = arith.constant 10 : index
    %c0_74 = arith.constant 0 : index
    %c0_75 = arith.constant 0 : index
    %110 = vector.load %arg6[%c10, %c0_74, %c0_75] : memref<18x8x128xf32, #tpu.memory_space<vmem>>, vector<1x8x128xf32>
    %111 = vector.shape_cast %110 : vector<1x8x128xf32> to vector<8x128xf32>
    %112 = arith.mulf %101, %7 : vector<8x128xf32>
    %113 = vector.shape_cast %112 : vector<8x128xf32> to vector<1x8x128xf32>
    %cst_76 = arith.constant dense<0.000000e+00> : vector<8x128xf32>
    %114 = vector.multi_reduction <add>, %113, %cst_76 [0] : vector<1x8x128xf32> to vector<8x128xf32>
    %115 = arith.addf %111, %114 : vector<8x128xf32>
    %c10_77 = arith.constant 10 : index
    %c0_78 = arith.constant 0 : index
    %c0_79 = arith.constant 0 : index
    %116 = vector.load %arg6[%c10_77, %c0_78, %c0_79] : memref<18x8x128xf32, #tpu.memory_space<vmem>>, vector<1x8x128xf32>
    %117 = vector.shape_cast %116 : vector<1x8x128xf32> to vector<8x128xf32>
    %118 = vector.shape_cast %115 : vector<8x128xf32> to vector<1x8x128xf32>
    tpu.vector_store %arg6[%c10_77, %c0_78, %c0_79], %118 {strides = array<i32>} : memref<18x8x128xf32, #tpu.memory_space<vmem>>, vector<1x8x128xf32>,
    %c11 = arith.constant 11 : index
    %c0_80 = arith.constant 0 : index
    %c0_81 = arith.constant 0 : index
    %119 = vector.load %arg6[%c11, %c0_80, %c0_81] : memref<18x8x128xf32, #tpu.memory_space<vmem>>, vector<1x8x128xf32>
    %120 = vector.shape_cast %119 : vector<1x8x128xf32> to vector<8x128xf32>
    %121 = arith.mulf %101, %101 : vector<8x128xf32>
    %122 = arith.mulf %121, %8 : vector<8x128xf32>
    %123 = vector.shape_cast %122 : vector<8x128xf32> to vector<1x8x128xf32>
    %cst_82 = arith.constant dense<0.000000e+00> : vector<8x128xf32>
    %124 = vector.multi_reduction <add>, %123, %cst_82 [0] : vector<1x8x128xf32> to vector<8x128xf32>
    %125 = arith.addf %120, %124 : vector<8x128xf32>
    %c11_83 = arith.constant 11 : index
    %c0_84 = arith.constant 0 : index
    %c0_85 = arith.constant 0 : index
    %126 = vector.load %arg6[%c11_83, %c0_84, %c0_85] : memref<18x8x128xf32, #tpu.memory_space<vmem>>, vector<1x8x128xf32>
    %127 = vector.shape_cast %126 : vector<1x8x128xf32> to vector<8x128xf32>
    %128 = vector.shape_cast %125 : vector<8x128xf32> to vector<1x8x128xf32>
    tpu.vector_store %arg6[%c11_83, %c0_84, %c0_85], %128 {strides = array<i32>} : memref<18x8x128xf32, #tpu.memory_space<vmem>>, vector<1x8x128xf32>,
    %c3_i32 = arith.constant 3 : i32
    %129 = vector.broadcast %c3_i32 : i32 to vector<8x128xi32>
    %130 = arith.cmpi eq, %6, %129 : vector<8x128xi32>
    %131 = arith.extui %130 : vector<8x128xi1> to vector<8x128xi32>
    %132 = arith.sitofp %131 : vector<8x128xi32> to vector<8x128xf32>
    %c12 = arith.constant 12 : index
    %c0_86 = arith.constant 0 : index
    %c0_87 = arith.constant 0 : index
    %133 = vector.load %arg6[%c12, %c0_86, %c0_87] : memref<18x8x128xf32, #tpu.memory_space<vmem>>, vector<1x8x128xf32>
    %134 = vector.shape_cast %133 : vector<1x8x128xf32> to vector<8x128xf32>
    %135 = vector.shape_cast %132 : vector<8x128xf32> to vector<1x8x128xf32>
    %cst_88 = arith.constant dense<0.000000e+00> : vector<8x128xf32>
    %136 = vector.multi_reduction <add>, %135, %cst_88 [0] : vector<1x8x128xf32> to vector<8x128xf32>
    %137 = arith.addf %134, %136 : vector<8x128xf32>
    %c12_89 = arith.constant 12 : index
    %c0_90 = arith.constant 0 : index
    %c0_91 = arith.constant 0 : index
    %138 = vector.load %arg6[%c12_89, %c0_90, %c0_91] : memref<18x8x128xf32, #tpu.memory_space<vmem>>, vector<1x8x128xf32>
    %139 = vector.shape_cast %138 : vector<1x8x128xf32> to vector<8x128xf32>
    %140 = vector.shape_cast %137 : vector<8x128xf32> to vector<1x8x128xf32>
    tpu.vector_store %arg6[%c12_89, %c0_90, %c0_91], %140 {strides = array<i32>} : memref<18x8x128xf32, #tpu.memory_space<vmem>>, vector<1x8x128xf32>,
    %c13 = arith.constant 13 : index
    %c0_92 = arith.constant 0 : index
    %c0_93 = arith.constant 0 : index
    %141 = vector.load %arg6[%c13, %c0_92, %c0_93] : memref<18x8x128xf32, #tpu.memory_space<vmem>>, vector<1x8x128xf32>
    %142 = vector.shape_cast %141 : vector<1x8x128xf32> to vector<8x128xf32>
    %143 = arith.mulf %132, %7 : vector<8x128xf32>
    %144 = vector.shape_cast %143 : vector<8x128xf32> to vector<1x8x128xf32>
    %cst_94 = arith.constant dense<0.000000e+00> : vector<8x128xf32>
    %145 = vector.multi_reduction <add>, %144, %cst_94 [0] : vector<1x8x128xf32> to vector<8x128xf32>
    %146 = arith.addf %142, %145 : vector<8x128xf32>
    %c13_95 = arith.constant 13 : index
    %c0_96 = arith.constant 0 : index
    %c0_97 = arith.constant 0 : index
    %147 = vector.load %arg6[%c13_95, %c0_96, %c0_97] : memref<18x8x128xf32, #tpu.memory_space<vmem>>, vector<1x8x128xf32>
    %148 = vector.shape_cast %147 : vector<1x8x128xf32> to vector<8x128xf32>
    %149 = vector.shape_cast %146 : vector<8x128xf32> to vector<1x8x128xf32>
    tpu.vector_store %arg6[%c13_95, %c0_96, %c0_97], %149 {strides = array<i32>} : memref<18x8x128xf32, #tpu.memory_space<vmem>>, vector<1x8x128xf32>,
    %c14 = arith.constant 14 : index
    %c0_98 = arith.constant 0 : index
    %c0_99 = arith.constant 0 : index
    %150 = vector.load %arg6[%c14, %c0_98, %c0_99] : memref<18x8x128xf32, #tpu.memory_space<vmem>>, vector<1x8x128xf32>
    %151 = vector.shape_cast %150 : vector<1x8x128xf32> to vector<8x128xf32>
    %152 = arith.mulf %132, %8 : vector<8x128xf32>
    %153 = vector.shape_cast %152 : vector<8x128xf32> to vector<1x8x128xf32>
    %cst_100 = arith.constant dense<0.000000e+00> : vector<8x128xf32>
    %154 = vector.multi_reduction <add>, %153, %cst_100 [0] : vector<1x8x128xf32> to vector<8x128xf32>
    %155 = arith.addf %151, %154 : vector<8x128xf32>
    %c14_101 = arith.constant 14 : index
    %c0_102 = arith.constant 0 : index
    %c0_103 = arith.constant 0 : index
    %156 = vector.load %arg6[%c14_101, %c0_102, %c0_103] : memref<18x8x128xf32, #tpu.memory_space<vmem>>, vector<1x8x128xf32>
    %157 = vector.shape_cast %156 : vector<1x8x128xf32> to vector<8x128xf32>
    %158 = vector.shape_cast %155 : vector<8x128xf32> to vector<1x8x128xf32>
    tpu.vector_store %arg6[%c14_101, %c0_102, %c0_103], %158 {strides = array<i32>} : memref<18x8x128xf32, #tpu.memory_space<vmem>>, vector<1x8x128xf32>,
    %c0_104 = arith.constant 0 : index
    %c2_105 = arith.constant 2 : index
    %c0_106 = arith.constant 0 : index
    %c0_107 = arith.constant 0 : index
    %159 = vector.load %arg4[%c0_104, %c2_105, %c0_106, %c0_107] : memref<1x3x8x128xf32, #tpu.memory_space<vmem>>, vector<1x1x8x128xf32>
    %160 = vector.shape_cast %159 : vector<1x1x8x128xf32> to vector<8x128xf32>
    %161 = arith.mulf %160, %160 : vector<8x128xf32>
    %c15 = arith.constant 15 : index
    %c0_108 = arith.constant 0 : index
    %c0_109 = arith.constant 0 : index
    %162 = vector.load %arg6[%c15, %c0_108, %c0_109] : memref<18x8x128xf32, #tpu.memory_space<vmem>>, vector<1x8x128xf32>
    %163 = vector.shape_cast %162 : vector<1x8x128xf32> to vector<8x128xf32>
    %164 = vector.shape_cast %160 : vector<8x128xf32> to vector<1x8x128xf32>
    %cst_110 = arith.constant dense<0.000000e+00> : vector<8x128xf32>
    %165 = vector.multi_reduction <add>, %164, %cst_110 [0] : vector<1x8x128xf32> to vector<8x128xf32>
    %166 = arith.addf %163, %165 : vector<8x128xf32>
    %c15_111 = arith.constant 15 : index
    %c0_112 = arith.constant 0 : index
    %c0_113 = arith.constant 0 : index
    %167 = vector.load %arg6[%c15_111, %c0_112, %c0_113] : memref<18x8x128xf32, #tpu.memory_space<vmem>>, vector<1x8x128xf32>
    %168 = vector.shape_cast %167 : vector<1x8x128xf32> to vector<8x128xf32>
    %169 = vector.shape_cast %166 : vector<8x128xf32> to vector<1x8x128xf32>
    tpu.vector_store %arg6[%c15_111, %c0_112, %c0_113], %169 {strides = array<i32>} : memref<18x8x128xf32, #tpu.memory_space<vmem>>, vector<1x8x128xf32>,
    %c16 = arith.constant 16 : index
    %c0_114 = arith.constant 0 : index
    %c0_115 = arith.constant 0 : index
    %170 = vector.load %arg6[%c16, %c0_114, %c0_115] : memref<18x8x128xf32, #tpu.memory_space<vmem>>, vector<1x8x128xf32>
    %171 = vector.shape_cast %170 : vector<1x8x128xf32> to vector<8x128xf32>
    %172 = arith.mulf %161, %7 : vector<8x128xf32>
    %173 = vector.shape_cast %172 : vector<8x128xf32> to vector<1x8x128xf32>
    %cst_116 = arith.constant dense<0.000000e+00> : vector<8x128xf32>
    %174 = vector.multi_reduction <add>, %173, %cst_116 [0] : vector<1x8x128xf32> to vector<8x128xf32>
    %175 = arith.addf %171, %174 : vector<8x128xf32>
    %c16_117 = arith.constant 16 : index
    %c0_118 = arith.constant 0 : index
    %c0_119 = arith.constant 0 : index
    %176 = vector.load %arg6[%c16_117, %c0_118, %c0_119] : memref<18x8x128xf32, #tpu.memory_space<vmem>>, vector<1x8x128xf32>
    %177 = vector.shape_cast %176 : vector<1x8x128xf32> to vector<8x128xf32>
    %178 = vector.shape_cast %175 : vector<8x128xf32> to vector<1x8x128xf32>
    tpu.vector_store %arg6[%c16_117, %c0_118, %c0_119], %178 {strides = array<i32>} : memref<18x8x128xf32, #tpu.memory_space<vmem>>, vector<1x8x128xf32>,
    %c17 = arith.constant 17 : index
    %c0_120 = arith.constant 0 : index
    %c0_121 = arith.constant 0 : index
    %179 = vector.load %arg6[%c17, %c0_120, %c0_121] : memref<18x8x128xf32, #tpu.memory_space<vmem>>, vector<1x8x128xf32>
    %180 = vector.shape_cast %179 : vector<1x8x128xf32> to vector<8x128xf32>
    %181 = arith.mulf %161, %161 : vector<8x128xf32>
    %182 = arith.mulf %181, %8 : vector<8x128xf32>
    %183 = vector.shape_cast %182 : vector<8x128xf32> to vector<1x8x128xf32>
    %cst_122 = arith.constant dense<0.000000e+00> : vector<8x128xf32>
    %184 = vector.multi_reduction <add>, %183, %cst_122 [0] : vector<1x8x128xf32> to vector<8x128xf32>
    %185 = arith.addf %180, %184 : vector<8x128xf32>
    %c17_123 = arith.constant 17 : index
    %c0_124 = arith.constant 0 : index
    %c0_125 = arith.constant 0 : index
    %186 = vector.load %arg6[%c17_123, %c0_124, %c0_125] : memref<18x8x128xf32, #tpu.memory_space<vmem>>, vector<1x8x128xf32>
    %187 = vector.shape_cast %186 : vector<1x8x128xf32> to vector<8x128xf32>
    %188 = vector.shape_cast %185 : vector<8x128xf32> to vector<1x8x128xf32>
    tpu.vector_store %arg6[%c17_123, %c0_124, %c0_125], %188 {strides = array<i32>} : memref<18x8x128xf32, #tpu.memory_space<vmem>>, vector<1x8x128xf32>,
    %c0_i32_126 = arith.constant 0 : i32
    %189 = arith.cmpi eq, %arg1, %c0_i32_126 : i32
    %190 = arith.extui %189 : i1 to i32
    %c0_i32_127 = arith.constant 0 : i32
    %191 = arith.cmpi ne, %190, %c0_i32_127 : i32
    scf.if %191 {
      %c0_128 = arith.constant 0 : index
      %c0_129 = arith.constant 0 : index
      %c0_130 = arith.constant 0 : index
      %192 = vector.load %arg6[%c0_128, %c0_129, %c0_130] : memref<18x8x128xf32, #tpu.memory_space<vmem>>, vector<1x8x128xf32>
      %193 = vector.shape_cast %192 : vector<1x8x128xf32> to vector<8x128xf32>
      %194 = vector.shape_cast %193 : vector<8x128xf32> to vector<1x8x128xf32>
      %cst_131 = arith.constant dense<0.000000e+00> : vector<1xf32>
      %195 = vector.multi_reduction <add>, %194, %cst_131 [1, 2] : vector<1x8x128xf32> to vector<1xf32>
      %196 = vector.shape_cast %195 : vector<1xf32> to vector<1x1x1xf32>
      %197 = vector.extract %196[0, 0, 0] : f32 from vector<1x1x1xf32>
      %c1_132 = arith.constant 1 : index
      %c0_133 = arith.constant 0 : index
      %c0_134 = arith.constant 0 : index
      %198 = vector.load %arg6[%c1_132, %c0_133, %c0_134] : memref<18x8x128xf32, #tpu.memory_space<vmem>>, vector<1x8x128xf32>
      %199 = vector.shape_cast %198 : vector<1x8x128xf32> to vector<8x128xf32>
      %200 = vector.shape_cast %199 : vector<8x128xf32> to vector<1x8x128xf32>
      %cst_135 = arith.constant dense<0.000000e+00> : vector<1xf32>
      %201 = vector.multi_reduction <add>, %200, %cst_135 [1, 2] : vector<1x8x128xf32> to vector<1xf32>
      %202 = vector.shape_cast %201 : vector<1xf32> to vector<1x1x1xf32>
      %203 = vector.extract %202[0, 0, 0] : f32 from vector<1x1x1xf32>
      %c2_136 = arith.constant 2 : index
      %c0_137 = arith.constant 0 : index
      %c0_138 = arith.constant 0 : index
      %204 = vector.load %arg6[%c2_136, %c0_137, %c0_138] : memref<18x8x128xf32, #tpu.memory_space<vmem>>, vector<1x8x128xf32>
      %205 = vector.shape_cast %204 : vector<1x8x128xf32> to vector<8x128xf32>
      %206 = vector.shape_cast %205 : vector<8x128xf32> to vector<1x8x128xf32>
      %cst_139 = arith.constant dense<0.000000e+00> : vector<1xf32>
      %207 = vector.multi_reduction <add>, %206, %cst_139 [1, 2] : vector<1x8x128xf32> to vector<1xf32>
      %208 = vector.shape_cast %207 : vector<1xf32> to vector<1x1x1xf32>
      %209 = vector.extract %208[0, 0, 0] : f32 from vector<1x1x1xf32>
      %cst_140 = arith.constant 0.000000e+00 : f32
      %210 = arith.cmpf oeq, %197, %cst_140 : f32
      %cst_141 = arith.constant 1.000000e+00 : f32
      %211 = arith.select %210, %cst_141, %197 : f32
      %212 = arith.divf %203, %211 : f32
      %213 = arith.divf %209, %211 : f32
      %214 = arith.mulf %212, %212 : f32
      %215 = arith.subf %213, %214 : f32
      %cst_142 = arith.constant 0.000000e+00 : f32
      %216 = arith.cmpf oeq, %215, %cst_142 : f32
      %cst_143 = arith.constant 1.000000e+00 : f32
      %217 = arith.select %216, %cst_143, %215 : f32
      %cst_144 = arith.constant 0.000000e+00 : f32
      %218 = arith.cmpf oeq, %197, %cst_144 : f32
      %cst_145 = arith.constant 0.000000e+00 : f32
      %219 = arith.cmpf oeq, %215, %cst_145 : f32
      %220 = arith.ori %218, %219 : i1
      %221 = arith.mulf %212, %212 : f32
      %222 = arith.divf %221, %217 : f32
      %cst_146 = arith.constant 0.000000e+00 : f32
      %223 = arith.select %220, %cst_146, %222 : f32
      %cst_147 = arith.constant 0.000000e+00 : f32
      %224 = arith.cmpf oeq, %197, %cst_147 : f32
      %cst_148 = arith.constant 0.000000e+00 : f32
      %225 = arith.select %224, %cst_148, %212 : f32
      %c3_149 = arith.constant 3 : index
      %c0_150 = arith.constant 0 : index
      %c0_151 = arith.constant 0 : index
      %226 = vector.load %arg6[%c3_149, %c0_150, %c0_151] : memref<18x8x128xf32, #tpu.memory_space<vmem>>, vector<1x8x128xf32>
      %227 = vector.shape_cast %226 : vector<1x8x128xf32> to vector<8x128xf32>
      %228 = vector.shape_cast %227 : vector<8x128xf32> to vector<1x8x128xf32>
      %cst_152 = arith.constant dense<0.000000e+00> : vector<1xf32>
      %229 = vector.multi_reduction <add>, %228, %cst_152 [1, 2] : vector<1x8x128xf32> to vector<1xf32>
      %230 = vector.shape_cast %229 : vector<1xf32> to vector<1x1x1xf32>
      %231 = vector.extract %230[0, 0, 0] : f32 from vector<1x1x1xf32>
      %c4_153 = arith.constant 4 : index
      %c0_154 = arith.constant 0 : index
      %c0_155 = arith.constant 0 : index
      %232 = vector.load %arg6[%c4_153, %c0_154, %c0_155] : memref<18x8x128xf32, #tpu.memory_space<vmem>>, vector<1x8x128xf32>
      %233 = vector.shape_cast %232 : vector<1x8x128xf32> to vector<8x128xf32>
      %234 = vector.shape_cast %233 : vector<8x128xf32> to vector<1x8x128xf32>
      %cst_156 = arith.constant dense<0.000000e+00> : vector<1xf32>
      %235 = vector.multi_reduction <add>, %234, %cst_156 [1, 2] : vector<1x8x128xf32> to vector<1xf32>
      %236 = vector.shape_cast %235 : vector<1xf32> to vector<1x1x1xf32>
      %237 = vector.extract %236[0, 0, 0] : f32 from vector<1x1x1xf32>
      %c5_157 = arith.constant 5 : index
      %c0_158 = arith.constant 0 : index
      %c0_159 = arith.constant 0 : index
      %238 = vector.load %arg6[%c5_157, %c0_158, %c0_159] : memref<18x8x128xf32, #tpu.memory_space<vmem>>, vector<1x8x128xf32>
      %239 = vector.shape_cast %238 : vector<1x8x128xf32> to vector<8x128xf32>
      %240 = vector.shape_cast %239 : vector<8x128xf32> to vector<1x8x128xf32>
      %cst_160 = arith.constant dense<0.000000e+00> : vector<1xf32>
      %241 = vector.multi_reduction <add>, %240, %cst_160 [1, 2] : vector<1x8x128xf32> to vector<1xf32>
      %242 = vector.shape_cast %241 : vector<1xf32> to vector<1x1x1xf32>
      %243 = vector.extract %242[0, 0, 0] : f32 from vector<1x1x1xf32>
      %cst_161 = arith.constant 0.000000e+00 : f32
      %244 = arith.cmpf oeq, %231, %cst_161 : f32
      %cst_162 = arith.constant 1.000000e+00 : f32
      %245 = arith.select %244, %cst_162, %231 : f32
      %246 = arith.divf %237, %245 : f32
      %247 = arith.divf %243, %245 : f32
      %248 = arith.mulf %246, %246 : f32
      %249 = arith.subf %247, %248 : f32
      %cst_163 = arith.constant 0.000000e+00 : f32
      %250 = arith.cmpf oeq, %249, %cst_163 : f32
      %cst_164 = arith.constant 1.000000e+00 : f32
      %251 = arith.select %250, %cst_164, %249 : f32
      %cst_165 = arith.constant 0.000000e+00 : f32
      %252 = arith.cmpf oeq, %231, %cst_165 : f32
      %cst_166 = arith.constant 0.000000e+00 : f32
      %253 = arith.cmpf oeq, %249, %cst_166 : f32
      %254 = arith.ori %252, %253 : i1
      %255 = arith.mulf %246, %246 : f32
      %256 = arith.divf %255, %251 : f32
      %cst_167 = arith.constant 0.000000e+00 : f32
      %257 = arith.select %254, %cst_167, %256 : f32
      %cst_168 = arith.constant 0.000000e+00 : f32
      %258 = arith.cmpf oeq, %231, %cst_168 : f32
      %cst_169 = arith.constant 0.000000e+00 : f32
      %259 = arith.select %258, %cst_169, %246 : f32
      %260 = arith.subf %223, %257 : f32
      %261 = arith.mulf %260, %260 : f32
      %cst_170 = arith.constant 0.949999988 : f32
      %262 = arith.mulf %cst_170, %261 : f32
      %263 = arith.subf %225, %259 : f32
      %264 = arith.mulf %263, %263 : f32
      %cst_171 = arith.constant 5.000000e-02 : f32
      %265 = arith.mulf %cst_171, %264 : f32
      %266 = arith.addf %262, %265 : f32
      %cst_172 = arith.constant 0.000000e+00 : f32
      %267 = arith.addf %cst_172, %266 : f32
      %c6_173 = arith.constant 6 : index
      %c0_174 = arith.constant 0 : index
      %c0_175 = arith.constant 0 : index
      %268 = vector.load %arg6[%c6_173, %c0_174, %c0_175] : memref<18x8x128xf32, #tpu.memory_space<vmem>>, vector<1x8x128xf32>
      %269 = vector.shape_cast %268 : vector<1x8x128xf32> to vector<8x128xf32>
      %270 = vector.shape_cast %269 : vector<8x128xf32> to vector<1x8x128xf32>
      %cst_176 = arith.constant dense<0.000000e+00> : vector<1xf32>
      %271 = vector.multi_reduction <add>, %270, %cst_176 [1, 2] : vector<1x8x128xf32> to vector<1xf32>
      %272 = vector.shape_cast %271 : vector<1xf32> to vector<1x1x1xf32>
      %273 = vector.extract %272[0, 0, 0] : f32 from vector<1x1x1xf32>
      %c7_177 = arith.constant 7 : index
      %c0_178 = arith.constant 0 : index
      %c0_179 = arith.constant 0 : index
      %274 = vector.load %arg6[%c7_177, %c0_178, %c0_179] : memref<18x8x128xf32, #tpu.memory_space<vmem>>, vector<1x8x128xf32>
      %275 = vector.shape_cast %274 : vector<1x8x128xf32> to vector<8x128xf32>
      %276 = vector.shape_cast %275 : vector<8x128xf32> to vector<1x8x128xf32>
      %cst_180 = arith.constant dense<0.000000e+00> : vector<1xf32>
      %277 = vector.multi_reduction <add>, %276, %cst_180 [1, 2] : vector<1x8x128xf32> to vector<1xf32>
      %278 = vector.shape_cast %277 : vector<1xf32> to vector<1x1x1xf32>
      %279 = vector.extract %278[0, 0, 0] : f32 from vector<1x1x1xf32>
      %c8_181 = arith.constant 8 : index
      %c0_182 = arith.constant 0 : index
      %c0_183 = arith.constant 0 : index
      %280 = vector.load %arg6[%c8_181, %c0_182, %c0_183] : memref<18x8x128xf32, #tpu.memory_space<vmem>>, vector<1x8x128xf32>
      %281 = vector.shape_cast %280 : vector<1x8x128xf32> to vector<8x128xf32>
      %282 = vector.shape_cast %281 : vector<8x128xf32> to vector<1x8x128xf32>
      %cst_184 = arith.constant dense<0.000000e+00> : vector<1xf32>
      %283 = vector.multi_reduction <add>, %282, %cst_184 [1, 2] : vector<1x8x128xf32> to vector<1xf32>
      %284 = vector.shape_cast %283 : vector<1xf32> to vector<1x1x1xf32>
      %285 = vector.extract %284[0, 0, 0] : f32 from vector<1x1x1xf32>
      %cst_185 = arith.constant 0.000000e+00 : f32
      %286 = arith.cmpf oeq, %273, %cst_185 : f32
      %cst_186 = arith.constant 1.000000e+00 : f32
      %287 = arith.select %286, %cst_186, %273 : f32
      %288 = arith.divf %279, %287 : f32
      %289 = arith.divf %285, %287 : f32
      %290 = arith.mulf %288, %288 : f32
      %291 = arith.subf %289, %290 : f32
      %cst_187 = arith.constant 0.000000e+00 : f32
      %292 = arith.cmpf oeq, %291, %cst_187 : f32
      %cst_188 = arith.constant 1.000000e+00 : f32
      %293 = arith.select %292, %cst_188, %291 : f32
      %cst_189 = arith.constant 0.000000e+00 : f32
      %294 = arith.cmpf oeq, %273, %cst_189 : f32
      %cst_190 = arith.constant 0.000000e+00 : f32
      %295 = arith.cmpf oeq, %291, %cst_190 : f32
      %296 = arith.ori %294, %295 : i1
      %297 = arith.mulf %288, %288 : f32
      %298 = arith.divf %297, %293 : f32
      %cst_191 = arith.constant 0.000000e+00 : f32
      %299 = arith.select %296, %cst_191, %298 : f32
      %cst_192 = arith.constant 0.000000e+00 : f32
      %300 = arith.cmpf oeq, %273, %cst_192 : f32
      %cst_193 = arith.constant 0.000000e+00 : f32
      %301 = arith.select %300, %cst_193, %288 : f32
      %c9_194 = arith.constant 9 : index
      %c0_195 = arith.constant 0 : index
      %c0_196 = arith.constant 0 : index
      %302 = vector.load %arg6[%c9_194, %c0_195, %c0_196] : memref<18x8x128xf32, #tpu.memory_space<vmem>>, vector<1x8x128xf32>
      %303 = vector.shape_cast %302 : vector<1x8x128xf32> to vector<8x128xf32>
      %304 = vector.shape_cast %303 : vector<8x128xf32> to vector<1x8x128xf32>
      %cst_197 = arith.constant dense<0.000000e+00> : vector<1xf32>
      %305 = vector.multi_reduction <add>, %304, %cst_197 [1, 2] : vector<1x8x128xf32> to vector<1xf32>
      %306 = vector.shape_cast %305 : vector<1xf32> to vector<1x1x1xf32>
      %307 = vector.extract %306[0, 0, 0] : f32 from vector<1x1x1xf32>
      %c10_198 = arith.constant 10 : index
      %c0_199 = arith.constant 0 : index
      %c0_200 = arith.constant 0 : index
      %308 = vector.load %arg6[%c10_198, %c0_199, %c0_200] : memref<18x8x128xf32, #tpu.memory_space<vmem>>, vector<1x8x128xf32>
      %309 = vector.shape_cast %308 : vector<1x8x128xf32> to vector<8x128xf32>
      %310 = vector.shape_cast %309 : vector<8x128xf32> to vector<1x8x128xf32>
      %cst_201 = arith.constant dense<0.000000e+00> : vector<1xf32>
      %311 = vector.multi_reduction <add>, %310, %cst_201 [1, 2] : vector<1x8x128xf32> to vector<1xf32>
      %312 = vector.shape_cast %311 : vector<1xf32> to vector<1x1x1xf32>
      %313 = vector.extract %312[0, 0, 0] : f32 from vector<1x1x1xf32>
      %c11_202 = arith.constant 11 : index
      %c0_203 = arith.constant 0 : index
      %c0_204 = arith.constant 0 : index
      %314 = vector.load %arg6[%c11_202, %c0_203, %c0_204] : memref<18x8x128xf32, #tpu.memory_space<vmem>>, vector<1x8x128xf32>
      %315 = vector.shape_cast %314 : vector<1x8x128xf32> to vector<8x128xf32>
      %316 = vector.shape_cast %315 : vector<8x128xf32> to vector<1x8x128xf32>
      %cst_205 = arith.constant dense<0.000000e+00> : vector<1xf32>
      %317 = vector.multi_reduction <add>, %316, %cst_205 [1, 2] : vector<1x8x128xf32> to vector<1xf32>
      %318 = vector.shape_cast %317 : vector<1xf32> to vector<1x1x1xf32>
      %319 = vector.extract %318[0, 0, 0] : f32 from vector<1x1x1xf32>
      %cst_206 = arith.constant 0.000000e+00 : f32
      %320 = arith.cmpf oeq, %307, %cst_206 : f32
      %cst_207 = arith.constant 1.000000e+00 : f32
      %321 = arith.select %320, %cst_207, %307 : f32
      %322 = arith.divf %313, %321 : f32
      %323 = arith.divf %319, %321 : f32
      %324 = arith.mulf %322, %322 : f32
      %325 = arith.subf %323, %324 : f32
      %cst_208 = arith.constant 0.000000e+00 : f32
      %326 = arith.cmpf oeq, %325, %cst_208 : f32
      %cst_209 = arith.constant 1.000000e+00 : f32
      %327 = arith.select %326, %cst_209, %325 : f32
      %cst_210 = arith.constant 0.000000e+00 : f32
      %328 = arith.cmpf oeq, %307, %cst_210 : f32
      %cst_211 = arith.constant 0.000000e+00 : f32
      %329 = arith.cmpf oeq, %325, %cst_211 : f32
      %330 = arith.ori %328, %329 : i1
      %331 = arith.mulf %322, %322 : f32
      %332 = arith.divf %331, %327 : f32
      %cst_212 = arith.constant 0.000000e+00 : f32
      %333 = arith.select %330, %cst_212, %332 : f32
      %cst_213 = arith.constant 0.000000e+00 : f32
      %334 = arith.cmpf oeq, %307, %cst_213 : f32
      %cst_214 = arith.constant 0.000000e+00 : f32
      %335 = arith.select %334, %cst_214, %322 : f32
      %336 = arith.subf %299, %333 : f32
      %337 = arith.mulf %336, %336 : f32
      %cst_215 = arith.constant 0.949999988 : f32
      %338 = arith.mulf %cst_215, %337 : f32
      %339 = arith.subf %301, %335 : f32
      %340 = arith.mulf %339, %339 : f32
      %cst_216 = arith.constant 5.000000e-02 : f32
      %341 = arith.mulf %cst_216, %340 : f32
      %342 = arith.addf %338, %341 : f32
      %343 = arith.addf %267, %342 : f32
      %c12_217 = arith.constant 12 : index
      %c0_218 = arith.constant 0 : index
      %c0_219 = arith.constant 0 : index
      %344 = vector.load %arg6[%c12_217, %c0_218, %c0_219] : memref<18x8x128xf32, #tpu.memory_space<vmem>>, vector<1x8x128xf32>
      %345 = vector.shape_cast %344 : vector<1x8x128xf32> to vector<8x128xf32>
      %346 = vector.shape_cast %345 : vector<8x128xf32> to vector<1x8x128xf32>
      %cst_220 = arith.constant dense<0.000000e+00> : vector<1xf32>
      %347 = vector.multi_reduction <add>, %346, %cst_220 [1, 2] : vector<1x8x128xf32> to vector<1xf32>
      %348 = vector.shape_cast %347 : vector<1xf32> to vector<1x1x1xf32>
      %349 = vector.extract %348[0, 0, 0] : f32 from vector<1x1x1xf32>
      %c13_221 = arith.constant 13 : index
      %c0_222 = arith.constant 0 : index
      %c0_223 = arith.constant 0 : index
      %350 = vector.load %arg6[%c13_221, %c0_222, %c0_223] : memref<18x8x128xf32, #tpu.memory_space<vmem>>, vector<1x8x128xf32>
      %351 = vector.shape_cast %350 : vector<1x8x128xf32> to vector<8x128xf32>
      %352 = vector.shape_cast %351 : vector<8x128xf32> to vector<1x8x128xf32>
      %cst_224 = arith.constant dense<0.000000e+00> : vector<1xf32>
      %353 = vector.multi_reduction <add>, %352, %cst_224 [1, 2] : vector<1x8x128xf32> to vector<1xf32>
      %354 = vector.shape_cast %353 : vector<1xf32> to vector<1x1x1xf32>
      %355 = vector.extract %354[0, 0, 0] : f32 from vector<1x1x1xf32>
      %c14_225 = arith.constant 14 : index
      %c0_226 = arith.constant 0 : index
      %c0_227 = arith.constant 0 : index
      %356 = vector.load %arg6[%c14_225, %c0_226, %c0_227] : memref<18x8x128xf32, #tpu.memory_space<vmem>>, vector<1x8x128xf32>
      %357 = vector.shape_cast %356 : vector<1x8x128xf32> to vector<8x128xf32>
      %358 = vector.shape_cast %357 : vector<8x128xf32> to vector<1x8x128xf32>
      %cst_228 = arith.constant dense<0.000000e+00> : vector<1xf32>
      %359 = vector.multi_reduction <add>, %358, %cst_228 [1, 2] : vector<1x8x128xf32> to vector<1xf32>
      %360 = vector.shape_cast %359 : vector<1xf32> to vector<1x1x1xf32>
      %361 = vector.extract %360[0, 0, 0] : f32 from vector<1x1x1xf32>
      %cst_229 = arith.constant 0.000000e+00 : f32
      %362 = arith.cmpf oeq, %349, %cst_229 : f32
      %cst_230 = arith.constant 1.000000e+00 : f32
      %363 = arith.select %362, %cst_230, %349 : f32
      %364 = arith.divf %355, %363 : f32
      %365 = arith.divf %361, %363 : f32
      %366 = arith.mulf %364, %364 : f32
      %367 = arith.subf %365, %366 : f32
      %cst_231 = arith.constant 0.000000e+00 : f32
      %368 = arith.cmpf oeq, %367, %cst_231 : f32
      %cst_232 = arith.constant 1.000000e+00 : f32
      %369 = arith.select %368, %cst_232, %367 : f32
      %cst_233 = arith.constant 0.000000e+00 : f32
      %370 = arith.cmpf oeq, %349, %cst_233 : f32
      %cst_234 = arith.constant 0.000000e+00 : f32
      %371 = arith.cmpf oeq, %367, %cst_234 : f32
      %372 = arith.ori %370, %371 : i1
      %373 = arith.mulf %364, %364 : f32
      %374 = arith.divf %373, %369 : f32
      %cst_235 = arith.constant 0.000000e+00 : f32
      %375 = arith.select %372, %cst_235, %374 : f32
      %cst_236 = arith.constant 0.000000e+00 : f32
      %376 = arith.cmpf oeq, %349, %cst_236 : f32
      %cst_237 = arith.constant 0.000000e+00 : f32
      %377 = arith.select %376, %cst_237, %364 : f32
      %c15_238 = arith.constant 15 : index
      %c0_239 = arith.constant 0 : index
      %c0_240 = arith.constant 0 : index
      %378 = vector.load %arg6[%c15_238, %c0_239, %c0_240] : memref<18x8x128xf32, #tpu.memory_space<vmem>>, vector<1x8x128xf32>
      %379 = vector.shape_cast %378 : vector<1x8x128xf32> to vector<8x128xf32>
      %380 = vector.shape_cast %379 : vector<8x128xf32> to vector<1x8x128xf32>
      %cst_241 = arith.constant dense<0.000000e+00> : vector<1xf32>
      %381 = vector.multi_reduction <add>, %380, %cst_241 [1, 2] : vector<1x8x128xf32> to vector<1xf32>
      %382 = vector.shape_cast %381 : vector<1xf32> to vector<1x1x1xf32>
      %383 = vector.extract %382[0, 0, 0] : f32 from vector<1x1x1xf32>
      %c16_242 = arith.constant 16 : index
      %c0_243 = arith.constant 0 : index
      %c0_244 = arith.constant 0 : index
      %384 = vector.load %arg6[%c16_242, %c0_243, %c0_244] : memref<18x8x128xf32, #tpu.memory_space<vmem>>, vector<1x8x128xf32>
      %385 = vector.shape_cast %384 : vector<1x8x128xf32> to vector<8x128xf32>
      %386 = vector.shape_cast %385 : vector<8x128xf32> to vector<1x8x128xf32>
      %cst_245 = arith.constant dense<0.000000e+00> : vector<1xf32>
      %387 = vector.multi_reduction <add>, %386, %cst_245 [1, 2] : vector<1x8x128xf32> to vector<1xf32>
      %388 = vector.shape_cast %387 : vector<1xf32> to vector<1x1x1xf32>
      %389 = vector.extract %388[0, 0, 0] : f32 from vector<1x1x1xf32>
      %c17_246 = arith.constant 17 : index
      %c0_247 = arith.constant 0 : index
      %c0_248 = arith.constant 0 : index
      %390 = vector.load %arg6[%c17_246, %c0_247, %c0_248] : memref<18x8x128xf32, #tpu.memory_space<vmem>>, vector<1x8x128xf32>
      %391 = vector.shape_cast %390 : vector<1x8x128xf32> to vector<8x128xf32>
      %392 = vector.shape_cast %391 : vector<8x128xf32> to vector<1x8x128xf32>
      %cst_249 = arith.constant dense<0.000000e+00> : vector<1xf32>
      %393 = vector.multi_reduction <add>, %392, %cst_249 [1, 2] : vector<1x8x128xf32> to vector<1xf32>
      %394 = vector.shape_cast %393 : vector<1xf32> to vector<1x1x1xf32>
      %395 = vector.extract %394[0, 0, 0] : f32 from vector<1x1x1xf32>
      %cst_250 = arith.constant 0.000000e+00 : f32
      %396 = arith.cmpf oeq, %383, %cst_250 : f32
      %cst_251 = arith.constant 1.000000e+00 : f32
      %397 = arith.select %396, %cst_251, %383 : f32
      %398 = arith.divf %389, %397 : f32
      %399 = arith.divf %395, %397 : f32
      %400 = arith.mulf %398, %398 : f32
      %401 = arith.subf %399, %400 : f32
      %cst_252 = arith.constant 0.000000e+00 : f32
      %402 = arith.cmpf oeq, %401, %cst_252 : f32
      %cst_253 = arith.constant 1.000000e+00 : f32
      %403 = arith.select %402, %cst_253, %401 : f32
      %cst_254 = arith.constant 0.000000e+00 : f32
      %404 = arith.cmpf oeq, %383, %cst_254 : f32
      %cst_255 = arith.constant 0.000000e+00 : f32
      %405 = arith.cmpf oeq, %401, %cst_255 : f32
      %406 = arith.ori %404, %405 : i1
      %407 = arith.mulf %398, %398 : f32
      %408 = arith.divf %407, %403 : f32
      %cst_256 = arith.constant 0.000000e+00 : f32
      %409 = arith.select %406, %cst_256, %408 : f32
      %cst_257 = arith.constant 0.000000e+00 : f32
      %410 = arith.cmpf oeq, %383, %cst_257 : f32
      %cst_258 = arith.constant 0.000000e+00 : f32
      %411 = arith.select %410, %cst_258, %398 : f32
      %412 = arith.subf %375, %409 : f32
      %413 = arith.mulf %412, %412 : f32
      %cst_259 = arith.constant 0.949999988 : f32
      %414 = arith.mulf %cst_259, %413 : f32
      %415 = arith.subf %377, %411 : f32
      %416 = arith.mulf %415, %415 : f32
      %cst_260 = arith.constant 5.000000e-02 : f32
      %417 = arith.mulf %cst_260, %416 : f32
      %418 = arith.addf %414, %417 : f32
      %419 = arith.addf %343, %418 : f32
      %420 = vector.broadcast %419 : f32 to vector<1x8x128xf32>
      %c0_261 = arith.constant 0 : index
      %c0_262 = arith.constant 0 : index
      %c0_263 = arith.constant 0 : index
      %421 = vector.load %arg5[%c0_261, %c0_262, %c0_263] : memref<1x8x128xf32, #tpu.memory_space<vmem>>, vector<1x8x128xf32>
      tpu.vector_store %arg5[%c0_261, %c0_262, %c0_263], %420 {strides = array<i32>} : memref<1x8x128xf32, #tpu.memory_space<vmem>>, vector<1x8x128xf32>,
    } else {
    }
    return
  }
  func.func @transform_0(%arg0: i32, %arg1: i32) -> (i32, i32, i32) {
    %c0_i32 = arith.constant 0 : i32
    %c0_i32_0 = arith.constant 0 : i32
    return %arg0, %arg1, %c0_i32 : i32, i32, i32
  }
  func.func @transform_1(%arg0: i32, %arg1: i32) -> (i32, i32, i32) {
    %c0_i32 = arith.constant 0 : i32
    %c0_i32_0 = arith.constant 0 : i32
    return %arg0, %arg1, %c0_i32 : i32, i32, i32
  }
  func.func @transform_2(%arg0: i32, %arg1: i32) -> (i32, i32, i32, i32) {
    %c0_i32 = arith.constant 0 : i32
    %c0_i32_0 = arith.constant 0 : i32
    %c0_i32_1 = arith.constant 0 : i32
    return %arg0, %c0_i32, %arg1, %c0_i32_0 : i32, i32, i32, i32
  }
  func.func @transform_3(%arg0: i32, %arg1: i32) -> (i32, i32, i32) {
    %c0_i32 = arith.constant 0 : i32
    %c0_i32_0 = arith.constant 0 : i32
    %c0_i32_1 = arith.constant 0 : i32
    return %arg0, %c0_i32, %c0_i32_0 : i32, i32, i32
  }
}

</mosaic_0001>

<llo_original>
// kernel: tpu_custom_call.1
$region0: #{tpu_custom_call.1}
  #allocation0 [shape = 'u32[]', space=smem, size = 0x4, offset = 0x4, fixed_abs, tag = 'smem constant byte address 0x4 - core index']
  #allocation1 [shape = 'u32[144,128]{1,0:T(1,128)}', space=vmem, size = 0x12000, scoped, tag = 'internal scratch']
  #allocation2 [shape = 'f32[18,8,128]{2,1,0:T(8,128)}', space=vmem, size = 0x12000, scoped, tag = 'scratch operand']
  %s0 = inlined_call_operand.hbm [shape: f32[2,8,128], index: 0, kind: input, shape index: {}]
  %s1 = inlined_call_operand.hbm [shape: s32[2,8,128], index: 1, kind: input, shape index: {}]
  %s2 = inlined_call_operand.hbm [shape: f32[2,3,8,128], index: 2, kind: input, shape index: {}]
  %s3 = inlined_call_operand.hbm [shape: f32[2,8,128], index: 3, kind: output, shape index: {}]
  %s4 = sld [smem:[#allocation0]]
  $region65: #{tpu_custom_call.1} parent=0
    _
  %s6 = ssub.s32 1, %s4
  %s7 = scalar_select 0, %s6, %s4
  $region1: #{tpu_custom_call.1} parent=0
    #allocation3 [shape = 'u8[8192]{0}', space=vmem, size = 0x2000, scoped, tag = 'input window, operand 0']
    #allocation4 [shape = 's32[2]{0}', space=sflag, size = 0x8, scoped, tag = 'scoped memory for tpu_custom_call.1']
    #allocation5 [shape = 's32[2]{0}', space=sflag, size = 0x8, scoped, tag = 'scoped memory for tpu_custom_call.1']
    #allocation6 [shape = 'u8[8192]{0}', space=vmem, size = 0x2000, scoped, tag = 'input window, operand 1']
    #allocation7 [shape = 's32[2]{0}', space=sflag, size = 0x8, scoped, tag = 'scoped memory for tpu_custom_call.1']
    #allocation8 [shape = 'u8[24576]{0}', space=vmem, size = 0x6000, scoped, tag = 'input window, operand 2']
    #allocation9 [shape = 'u8[8192]{0}', space=vmem, size = 0x2000, scoped, tag = 'output window, operand 0']
    %8 = vsyncpa [#allocation4], 0
    %s9 = scalar_lea.sflag [#allocation4], 1
    %10 = vsyncpa %s9, 0
    %11 = vsyncpa [#allocation7], 0
    %s12 = scalar_lea.sflag [#allocation7], 1
    %13 = vsyncpa %s12, 0
    %14 = vsyncpa [#allocation5], 0
    %s15 = scalar_lea.sflag [#allocation5], 1
    %16 = vsyncpa %s15, 0
    loop: start=0, step=1, limit=4
    $region2: #{tpu_custom_call.1} parent=1 // loop_pre_header
      _
    $region3: #{tpu_custom_call.1} parent=1 // loop_header
      %s18 = sphi 0, %s22
      %p19 = scmp.ge.s32.totalorder %s18, 4
      %s25 = sphi 0, %s37
      %s26 = sphi 0, %s33
      %s27 = sphi 0, %s25
      %s28 = sphi 0, %s26
      %s29 = sphi 0, %s27
      %s30 = sphi 0, %s28
      %s42 = sphi 0, %s44
      %s45 = sphi 0, %s42
      %s46 = sphi 0, %s45
      %s62 = sphi 0, %s46
      %s70 = sphi 0, %s72
      %s73 = sphi 0, %s70
      %s74 = sphi 0, %s73
      %s90 = sphi 0, %s74
      %s98 = sphi 0, %s100
      %s101 = sphi 0, %s98
      %s102 = sphi 0, %s101
      %s118 = sphi 0, %s102
      %s124 = sphi 0, %s126
      %s127 = sphi 0, %s124
      %s128 = sphi 0, %s127
      %s144 = sphi 0, %s128
    $region4: #{tpu_custom_call.1} parent=1 // loop_header_branch
      %21 = sbr.rel (%p19) target = $region8
    $region5: #{tpu_custom_call.1} parent=1 // loop_body
      %s23 = ssub.s32 %s18, 1
      %s24 = ssub.s32 %s18, 2
      %s31 = sadd.s32 1, %s26
      %p32 = scmp.ge.s32.totalorder %s31, 1
      %s33 = scalar_select %p32, 0, %s31
      %s34 = sadd.s32 1, %s25
      %s35 = scalar_select %p32, %s34, %s25
      %p36 = scmp.ge.s32.totalorder %s35, 2
      %s37 = scalar_select %p36, 0, %s35
      %s38 = ssub.s32 %s25, %s37
      %s39 = ssub.s32 %s26, %s33
      %s40 = sor.u32 %s38, %s39
      %p41 = scmp.eq.s32.totalorder %s40, 0
      %s43 = sadd.s32 %s42, 1
      %s44 = scalar_select %p41, %s42, %s43
      %p47 = pneg %p41
      %p48 = scmp.eq.s32.totalorder %s18, 1
      %p49 = por %p47, %p48
      %p50 = scmp.ne.s32.totalorder %s42, %s45
      %p51 = scmp.eq.s32.totalorder %s18, 0
      %p52 = por %p50, %p51
      %p53 = scmp.ne.s32.totalorder %s42, %s45
      %p54 = scmp.eq.s32.totalorder %s23, 1
      %p55 = por %p53, %p54
      %p56 = scmp.ne.s32.totalorder %s45, %s46
      %p57 = scmp.eq.s32.totalorder %s23, 0
      %p58 = por %p56, %p57
      %p59 = scmp.ne.s32.totalorder %s45, %s46
      %p60 = scmp.eq.s32.totalorder %s24, 1
      %p61 = por %p59, %p60
      %p63 = scmp.ne.s32.totalorder %s46, %s62
      %p64 = scmp.eq.s32.totalorder %s24, 0
      %p65 = por %p63, %p64
      %s66 = ssub.s32 %s25, %s37
      %s67 = ssub.s32 %s26, %s33
      %s68 = sor.u32 %s66, %s67
      %p69 = scmp.eq.s32.totalorder %s68, 0
      %s71 = sadd.s32 %s70, 1
      %s72 = scalar_select %p69, %s70, %s71
      %p75 = pneg %p69
      %p76 = scmp.eq.s32.totalorder %s18, 1
      %p77 = por %p75, %p76
      %p78 = scmp.ne.s32.totalorder %s70, %s73
      %p79 = scmp.eq.s32.totalorder %s18, 0
      %p80 = por %p78, %p79
      %p81 = scmp.ne.s32.totalorder %s70, %s73
      %p82 = scmp.eq.s32.totalorder %s23, 1
      %p83 = por %p81, %p82
      %p84 = scmp.ne.s32.totalorder %s73, %s74
      %p85 = scmp.eq.s32.totalorder %s23, 0
      %p86 = por %p84, %p85
      %p87 = scmp.ne.s32.totalorder %s73, %s74
      %p88 = scmp.eq.s32.totalorder %s24, 1
      %p89 = por %p87, %p88
      %p91 = scmp.ne.s32.totalorder %s74, %s90
      %p92 = scmp.eq.s32.totalorder %s24, 0
      %p93 = por %p91, %p92
      %s94 = ssub.s32 %s25, %s37
      %s95 = ssub.s32 %s26, %s33
      %s96 = sor.u32 %s94, %s95
      %p97 = scmp.eq.s32.totalorder %s96, 0
      %s99 = sadd.s32 %s98, 1
      %s100 = scalar_select %p97, %s98, %s99
      %p103 = pneg %p97
      %p104 = scmp.eq.s32.totalorder %s18, 1
      %p105 = por %p103, %p104
      %p106 = scmp.ne.s32.totalorder %s98, %s101
      %p107 = scmp.eq.s32.totalorder %s18, 0
      %p108 = por %p106, %p107
      %p109 = scmp.ne.s32.totalorder %s98, %s101
      %p110 = scmp.eq.s32.totalorder %s23, 1
      %p111 = por %p109, %p110
      %p112 = scmp.ne.s32.totalorder %s101, %s102
      %p113 = scmp.eq.s32.totalorder %s23, 0
      %p114 = por %p112, %p113
      %p115 = scmp.ne.s32.totalorder %s101, %s102
      %p116 = scmp.eq.s32.totalorder %s24, 1
      %p117 = por %p115, %p116
      %p119 = scmp.ne.s32.totalorder %s102, %s118
      %p120 = scmp.eq.s32.totalorder %s24, 0
      %p121 = por %p119, %p120
      %s122 = ssub.s32 %s25, %s37
      %p123 = scmp.eq.s32.totalorder %s122, 0
      %s125 = sadd.s32 %s124, 1
      %s126 = scalar_select %p123, %s124, %s125
      %p129 = pneg %p123
      %p130 = scmp.eq.s32.totalorder %s18, 1
      %p131 = por %p129, %p130
      %p132 = scmp.ne.s32.totalorder %s124, %s127
      %p133 = scmp.eq.s32.totalorder %s18, 0
      %p134 = por %p132, %p133
      %p135 = scmp.ne.s32.totalorder %s124, %s127
      %p136 = scmp.eq.s32.totalorder %s23, 1
      %p137 = por %p135, %p136
      %p138 = scmp.ne.s32.totalorder %s127, %s128
      %p139 = scmp.eq.s32.totalorder %s23, 0
      %p140 = por %p138, %p139
      %p141 = scmp.ne.s32.totalorder %s127, %s128
      %p142 = scmp.eq.s32.totalorder %s24, 1
      %p143 = por %p141, %p142
      %p145 = scmp.ne.s32.totalorder %s128, %s144
      %p146 = scmp.eq.s32.totalorder %s24, 0
      %p147 = por %p145, %p146
      %p148 = scmp.le.s32.totalorder 1, %s18
      %p149 = scmp.lt.s32.totalorder %s18, 3
      %p150 = pnand %p148, %p149
      %p151 = pneg %p150
      // Predicated region
      $region9: #{tpu_custom_call.1} parent=5 // pred_check
        _
      $region10: #{tpu_custom_call.1} parent=5 // pred_check_branch
        %153 = sbr.rel (%p150) target = $region12
      $region11: #{tpu_custom_call.1} parent=5 // pred_region
        %s154 = ssub.s32 %s18, 1
      $region12: #{tpu_custom_call.1} parent=5 // pred_fallthru
        _
      %p155 = scmp.lt.s32.totalorder %s18, 2
      // Predicated region
      $region13: #{tpu_custom_call.1} parent=5 // pred_check
        %p156 = pneg %p155
      $region14: #{tpu_custom_call.1} parent=5 // pred_check_branch
        %158 = sbr.rel (%p156) target = $region16
      $region15: #{tpu_custom_call.1} parent=5 // pred_region
        // Predicated region
        $region17: #{tpu_custom_call.1} parent=15 // pred_check
          %p159 = pneg %p52
        $region18: #{tpu_custom_call.1} parent=15 // pred_check_branch
          %161 = sbr.rel (%p159) target = $region20
        $region19: #{tpu_custom_call.1} parent=15 // pred_region
          %s162 = sand.u32 %s42, 1
          %s163 = scalar_lea.sflag [#allocation4], %s162
          %s164 = sand.u32 %s42, 1
          %s165 = smul.addr %s164, 8
          %s166 = scalar_lea.vmem [#allocation3], %s165
          %s168 = ssub.s32 128, 128
          %169 = vsyncadd %s163, %s168
          %s170 = sadd.s32 %s26, %s25
          %s171 = smul.addr %s170, 128
          %s172 = scalar_lea.hbm %s0, %s171
          %s174 = sshll.u32 %s166, 4
          %s175 = int_to_ptr.vmem [resolvable:$true] %s174
          %177 = dma.hbm_to_vmem [thread:$0]  %s172, 128, %s175, %s163
        $region20: #{tpu_custom_call.1} parent=15 // pred_fallthru
          _
        // Predicated region
        $region21: #{tpu_custom_call.1} parent=15 // pred_check
          %p178 = pneg %p80
        $region22: #{tpu_custom_call.1} parent=15 // pred_check_branch
          %180 = sbr.rel (%p178) target = $region24
        $region23: #{tpu_custom_call.1} parent=15 // pred_region
          %s181 = sand.u32 %s18, 1
          %s182 = scalar_lea.sflag [#allocation7], %s181
          %s183 = sand.u32 %s70, 1
          %s184 = smul.addr %s183, 8
          %s185 = scalar_lea.vmem [#allocation6], %s184
          %s187 = ssub.s32 128, 128
          %188 = vsyncadd %s182, %s187
          %s189 = sadd.s32 %s26, %s25
          %s190 = smul.addr %s189, 128
          %s191 = scalar_lea.hbm %s1, %s190
          %s193 = sshll.u32 %s185, 4
          %s194 = int_to_ptr.vmem [resolvable:$true] %s193
          %196 = dma.hbm_to_vmem [thread:$0]  %s191, 128, %s194, %s182
        $region24: #{tpu_custom_call.1} parent=15 // pred_fallthru
          _
        // Predicated region
        $region25: #{tpu_custom_call.1} parent=15 // pred_check
          %p197 = pneg %p108
        $region26: #{tpu_custom_call.1} parent=15 // pred_check_branch
          %199 = sbr.rel (%p197) target = $region28
        $region27: #{tpu_custom_call.1} parent=15 // pred_region
          %s200 = sand.u32 %s18, 1
          %s201 = scalar_lea.sflag [#allocation7], %s200
          %s202 = sand.u32 %s98, 1
          %s203 = smul.addr %s202, 24
          %s204 = scalar_lea.vmem [#allocation8], %s203
          %s206 = ssub.s32 384, 384
          %207 = vsyncadd %s201, %s206
          %s208 = smul.addr %s25, 3
          %s209 = sadd.s32 %s26, %s208
          %s210 = smul.addr %s209, 128
          %s211 = scalar_lea.hbm %s2, %s210
          %s212 = sshll.u32 %s204, 4
          %s213 = int_to_ptr.vmem [resolvable:$true] %s212
          %218 = dma.hbm_to_vmem [thread:$0]  %s211, 384, %s213, %s201, 128, 128, 8
        $region28: #{tpu_custom_call.1} parent=15 // pred_fallthru
          _
      $region16: #{tpu_custom_call.1} parent=5 // pred_fallthru
        _
      %p219 = scmp.le.s32.totalorder 1, %s18
      %p220 = scmp.lt.s32.totalorder %s18, 3
      %p221 = pnand %p219, %p220
      %p222 = pneg %p221
      // Predicated region
      $region29: #{tpu_custom_call.1} parent=5 // pred_check
        _
      $region30: #{tpu_custom_call.1} parent=5 // pred_check_branch
        %224 = sbr.rel (%p221) target = $region32
      $region31: #{tpu_custom_call.1} parent=5 // pred_region
        %s225 = ssub.s32 %s18, 1
        %s226 = sand.u32 %s45, 1
        %s227 = scalar_lea.sflag [#allocation4], %s226
        %s228 = sand.u32 %s45, 1
        %s229 = smul.addr %s228, 8
        %s230 = scalar_lea.vmem [#allocation3], %s229
        // Predicated region
        $region33: #{tpu_custom_call.1} parent=31 // pred_check
          %p231 = pneg %p58
        $region34: #{tpu_custom_call.1} parent=31 // pred_check_branch
          %233 = sbr.rel (%p231) target = $region36
        $region35: #{tpu_custom_call.1} parent=31 // pred_region
          %234 = dma.done %s227, 128
        $region36: #{tpu_custom_call.1} parent=31 // pred_fallthru
          _
        %s235 = sand.u32 %s23, 1
        %s236 = scalar_lea.sflag [#allocation7], %s235
        %s237 = sand.u32 %s73, 1
        %s238 = smul.addr %s237, 8
        %s239 = scalar_lea.vmem [#allocation6], %s238
        // Predicated region
        $region37: #{tpu_custom_call.1} parent=31 // pred_check
          %p240 = pneg %p86
        $region38: #{tpu_custom_call.1} parent=31 // pred_check_branch
          %242 = sbr.rel (%p240) target = $region40
        $region39: #{tpu_custom_call.1} parent=31 // pred_region
          %243 = dma.done %s236, 128
        $region40: #{tpu_custom_call.1} parent=31 // pred_fallthru
          _
        %s244 = sand.u32 %s23, 1
        %s245 = scalar_lea.sflag [#allocation7], %s244
        %s246 = sand.u32 %s101, 1
        %s247 = smul.addr %s246, 24
        %s248 = scalar_lea.vmem [#allocation8], %s247
        // Predicated region
        $region41: #{tpu_custom_call.1} parent=31 // pred_check
          %p249 = pneg %p114
        $region42: #{tpu_custom_call.1} parent=31 // pred_check_branch
          %251 = sbr.rel (%p249) target = $region44
        $region43: #{tpu_custom_call.1} parent=31 // pred_region
          %252 = dma.done %s245, 384
        $region44: #{tpu_custom_call.1} parent=31 // pred_fallthru
          _
        %s253 = sand.u32 %s45, 1
        %s254 = scalar_lea.sflag [#allocation4], %s253
        %s255 = sand.u32 %s45, 1
        %s256 = smul.addr %s255, 8
        %s257 = scalar_lea.vmem [#allocation3], %s256
        %p258 = pneg %p58
        %p259 = pneg %p55
        %s260 = sand.u32 %s23, 1
        %s261 = scalar_lea.sflag [#allocation7], %s260
        %s262 = sand.u32 %s73, 1
        %s263 = smul.addr %s262, 8
        %s264 = scalar_lea.vmem [#allocation6], %s263
        %p265 = pneg %p86
        %p266 = pneg %p83
        %s267 = sand.u32 %s23, 1
        %s268 = scalar_lea.sflag [#allocation7], %s267
        %s269 = sand.u32 %s101, 1
        %s270 = smul.addr %s269, 24
        %s271 = scalar_lea.vmem [#allocation8], %s270
        %p272 = pneg %p114
        %p273 = pneg %p111
        %p274 = pneg %p140
        %p275 = pneg %p137
        %s276 = sand.u32 %s127, 1
        %s277 = scalar_lea.sflag [#allocation5], %s276
        %s278 = sand.u32 %s127, 1
        %s279 = smul.addr %s278, 8
        %s280 = scalar_lea.vmem [#allocation9], %s279
        %p281 = scmp.eq.s32.totalorder %s28, 0
        // Predicated region
        $region45: #{tpu_custom_call.1} parent=31 // pred_check
          %p282 = pneg %p281
        $region46: #{tpu_custom_call.1} parent=31 // pred_check_branch
          %284 = sbr.rel (%p282) target = $region48
        $region47: #{tpu_custom_call.1} parent=31 // pred_region
          %285 = vst [vmem:[#allocation2] sm:$0xff] 0.0
          %286 = vst [vmem:[#allocation2 + $0x8] sm:$0xff] 0.0
          %287 = vst [vmem:[#allocation2 + $0x10] sm:$0xff] 0.0
          %288 = vst [vmem:[#allocation2 + $0x18] sm:$0xff] 0.0
          %289 = vst [vmem:[#allocation2 + $0x20] sm:$0xff] 0.0
          %290 = vst [vmem:[#allocation2 + $0x28] sm:$0xff] 0.0
          %291 = vst [vmem:[#allocation2 + $0x30] sm:$0xff] 0.0
          %292 = vst [vmem:[#allocation2 + $0x38] sm:$0xff] 0.0
          %293 = vst [vmem:[#allocation2 + $0x40] sm:$0xff] 0.0
          %294 = vst [vmem:[#allocation2 + $0x48] sm:$0xff] 0.0
          %295 = vst [vmem:[#allocation2 + $0x50] sm:$0xff] 0.0
          %296 = vst [vmem:[#allocation2 + $0x58] sm:$0xff] 0.0
          %297 = vst [vmem:[#allocation2 + $0x60] sm:$0xff] 0.0
          %298 = vst [vmem:[#allocation2 + $0x68] sm:$0xff] 0.0
          %299 = vst [vmem:[#allocation2 + $0x70] sm:$0xff] 0.0
          %300 = vst [vmem:[#allocation2 + $0x78] sm:$0xff] 0.0
          %301 = vst [vmem:[#allocation2 + $0x80] sm:$0xff] 0.0
          %302 = vst [vmem:[#allocation2 + $0x88] sm:$0xff] 0.0
        $region48: #{tpu_custom_call.1} parent=31 // pred_fallthru
          _
        %v303 = vld [vmem:[%s230] sm:$0xff]
        %v304 = vld [vmem:[%s239] sm:$0xff]
        %v305 = vmul.f32 %v303, %v303
        %v306 = vmul.f32 %v305, %v305
        %vm307 = vcmp.eq.s32.totalorder %v304, 1
        %v308 = vsel %vm307, 1, 0
        %v309 = vcvt.s32.f32 %v308
        %v310 = vld [vmem:[#allocation2] sm:$0xff]
        %v311 = vadd.f32 %v309, 0.0
        %v312 = vadd.f32 %v310, %v311
        %313 = vst [vmem:[#allocation2] sm:$0xff] %v312
        %s314 = scalar_lea.vmem [#allocation2], 8
        %v315 = vld [vmem:[%s314] sm:$0xff]
        %v316 = vmul.f32 %v309, %v305
        %v317 = vadd.f32 %v316, 0.0
        %v318 = vadd.f32 %v315, %v317
        %319 = vst [vmem:[%s314] sm:$0xff] %v318
        %s320 = scalar_lea.vmem [#allocation2], 16
        %v321 = vld [vmem:[%s320] sm:$0xff]
        %v322 = vmul.f32 %v309, %v306
        %v323 = vadd.f32 %v322, 0.0
        %v324 = vadd.f32 %v321, %v323
        %325 = vst [vmem:[%s320] sm:$0xff] %v324
        %v326 = vld [vmem:[%s248] sm:$0xff]
        %v327 = vmul.f32 %v326, %v326
        %s328 = scalar_lea.vmem [#allocation2], 24
        %v329 = vld [vmem:[%s328] sm:$0xff]
        %v330 = vadd.f32 %v326, 0.0
        %v331 = vadd.f32 %v329, %v330
        %332 = vst [vmem:[%s328] sm:$0xff] %v331
        %s333 = scalar_lea.vmem [#allocation2], 32
        %v334 = vld [vmem:[%s333] sm:$0xff]
        %v335 = vmul.f32 %v327, %v305
        %v336 = vadd.f32 %v335, 0.0
        %v337 = vadd.f32 %v334, %v336
        %338 = vst [vmem:[%s333] sm:$0xff] %v337
        %s339 = scalar_lea.vmem [#allocation2], 40
        %v340 = vld [vmem:[%s339] sm:$0xff]
        %v341 = vmul.f32 %v327, %v327
        %v342 = vmul.f32 %v341, %v306
        %v343 = vadd.f32 %v342, 0.0
        %v344 = vadd.f32 %v340, %v343
        %345 = vst [vmem:[%s339] sm:$0xff] %v344
        %vm346 = vcmp.eq.s32.totalorder %v304, 2
        %v347 = vsel %vm346, 1, 0
        %v348 = vcvt.s32.f32 %v347
        %s349 = scalar_lea.vmem [#allocation2], 48
        %v350 = vld [vmem:[%s349] sm:$0xff]
        %v351 = vadd.f32 %v348, 0.0
        %v352 = vadd.f32 %v350, %v351
        %353 = vst [vmem:[%s349] sm:$0xff] %v352
        %s354 = scalar_lea.vmem [#allocation2], 56
        %v355 = vld [vmem:[%s354] sm:$0xff]
        %v356 = vmul.f32 %v348, %v305
        %v357 = vadd.f32 %v356, 0.0
        %v358 = vadd.f32 %v355, %v357
        %359 = vst [vmem:[%s354] sm:$0xff] %v358
        %s360 = scalar_lea.vmem [#allocation2], 64
        %v361 = vld [vmem:[%s360] sm:$0xff]
        %v362 = vmul.f32 %v348, %v306
        %v363 = vadd.f32 %v362, 0.0
        %v364 = vadd.f32 %v361, %v363
        %365 = vst [vmem:[%s360] sm:$0xff] %v364
        %s366 = scalar_lea.vmem %s248, 8 [#allocation8]
        %v367 = vld [vmem:[%s366] sm:$0xff]
        %v368 = vmul.f32 %v367, %v367
        %s369 = scalar_lea.vmem [#allocation2], 72
        %v370 = vld [vmem:[%s369] sm:$0xff]
        %v371 = vadd.f32 %v367, 0.0
        %v372 = vadd.f32 %v370, %v371
        %373 = vst [vmem:[%s369] sm:$0xff] %v372
        %s374 = scalar_lea.vmem [#allocation2], 80
        %v375 = vld [vmem:[%s374] sm:$0xff]
        %v376 = vmul.f32 %v368, %v305
        %v377 = vadd.f32 %v376, 0.0
        %v378 = vadd.f32 %v375, %v377
        %379 = vst [vmem:[%s374] sm:$0xff] %v378
        %s380 = scalar_lea.vmem [#allocation2], 88
        %v381 = vld [vmem:[%s380] sm:$0xff]
        %v382 = vmul.f32 %v368, %v368
        %v383 = vmul.f32 %v382, %v306
        %v384 = vadd.f32 %v383, 0.0
        %v385 = vadd.f32 %v381, %v384
        %386 = vst [vmem:[%s380] sm:$0xff] %v385
        %vm387 = vcmp.eq.s32.totalorder %v304, 3
        %v388 = vsel %vm387, 1, 0
        %v389 = vcvt.s32.f32 %v388
        %s390 = scalar_lea.vmem [#allocation2], 96
        %v391 = vld [vmem:[%s390] sm:$0xff]
        %v392 = vadd.f32 %v389, 0.0
        %v393 = vadd.f32 %v391, %v392
        %394 = vst [vmem:[%s390] sm:$0xff] %v393
        %s395 = scalar_lea.vmem [#allocation2], 104
        %v396 = vld [vmem:[%s395] sm:$0xff]
        %v397 = vmul.f32 %v389, %v305
        %v398 = vadd.f32 %v397, 0.0
        %v399 = vadd.f32 %v396, %v398
        %400 = vst [vmem:[%s395] sm:$0xff] %v399
        %s401 = scalar_lea.vmem [#allocation2], 112
        %v402 = vld [vmem:[%s401] sm:$0xff]
        %v403 = vmul.f32 %v389, %v306
        %v404 = vadd.f32 %v403, 0.0
        %v405 = vadd.f32 %v402, %v404
        %406 = vst [vmem:[%s401] sm:$0xff] %v405
        %s407 = scalar_lea.vmem %s248, 16 [#allocation8]
        %v408 = vld [vmem:[%s407] sm:$0xff]
        %v409 = vmul.f32 %v408, %v408
        %s410 = scalar_lea.vmem [#allocation2], 120
        %v411 = vld [vmem:[%s410] sm:$0xff]
        %v412 = vadd.f32 %v408, 0.0
        %v413 = vadd.f32 %v411, %v412
        %414 = vst [vmem:[%s410] sm:$0xff] %v413
        %s415 = scalar_lea.vmem [#allocation2], 128
        %v416 = vld [vmem:[%s415] sm:$0xff]
        %v417 = vmul.f32 %v409, %v305
        %v418 = vadd.f32 %v417, 0.0
        %v419 = vadd.f32 %v416, %v418
        %420 = vst [vmem:[%s415] sm:$0xff] %v419
        %s421 = scalar_lea.vmem [#allocation2], 136
        %v422 = vld [vmem:[%s421] sm:$0xff]
        %v423 = vmul.f32 %v409, %v409
        %v424 = vmul.f32 %v423, %v306
        %v425 = vadd.f32 %v424, 0.0
        %v426 = vadd.f32 %v422, %v425
        %427 = vst [vmem:[%s421] sm:$0xff] %v426
        // Predicated region
        $region49: #{tpu_custom_call.1} parent=31 // pred_check
          %p428 = pneg %p281
        $region50: #{tpu_custom_call.1} parent=31 // pred_check_branch
          %430 = sbr.rel (%p428) target = $region52
        $region51: #{tpu_custom_call.1} parent=31 // pred_region
          %v431 = vld [vmem:[#allocation2] sm:$0xff]
          %432 = vadd.xlane.f32.xlu0 %v431
          %v433 = vpop.xlane.xlu0 %432
          %v434 = vrot.slane %v433, 4
          %v435 = vadd.f32 %v433, %v434
          %v436 = vrot.slane %v435, 2
          %v437 = vadd.f32 %v435, %v436
          %v438 = vrot.slane %v437, 1
          %v439 = vadd.f32 %v437, %v438
          %s440 = vtos %v439
          %v441 = vld [vmem:[%s314] sm:$0xff]
          %442 = vadd.xlane.f32.xlu0 %v441
          %v443 = vpop.xlane.xlu0 %442
          %v444 = vrot.slane %v443, 4
          %v445 = vadd.f32 %v443, %v444
          %v446 = vrot.slane %v445, 2
          %v447 = vadd.f32 %v445, %v446
          %v448 = vrot.slane %v447, 1
          %v449 = vadd.f32 %v447, %v448
          %s450 = vtos %v449
          %v451 = vld [vmem:[%s320] sm:$0xff]
          %452 = vadd.xlane.f32.xlu0 %v451
          %v453 = vpop.xlane.xlu0 %452
          %v454 = vrot.slane %v453, 4
          %v455 = vadd.f32 %v453, %v454
          %v456 = vrot.slane %v455, 2
          %v457 = vadd.f32 %v455, %v456
          %v458 = vrot.slane %v457, 1
          %v459 = vadd.f32 %v457, %v458
          %s460 = vtos %v459
          %p461 = scmp.eq.f32.partialorder %s440, 0.0
          %s462 = scalar_select %p461, 1.0, %s440
          %v463 = vstv %s462
          %v464 = vrcp.pop %v463
          %s465 = vtos %v464
          %s466 = smul.f32 %s450, %s465
          %v467 = vstv %s462
          %v468 = vrcp.pop %v467
          %s469 = vtos %v468
          %s470 = smul.f32 %s460, %s469
          %s471 = smul.f32 %s466, %s466
          %s472 = ssub.f32 %s470, %s471
          %p473 = scmp.eq.f32.partialorder %s472, 0.0
          %s474 = scalar_select %p473, 1.0, %s472
          %p475 = por %p461, %p473
          %v476 = vstv %s474
          %v477 = vrcp.pop %v476
          %s478 = vtos %v477
          %s479 = smul.f32 %s471, %s478
          %s480 = scalar_select %p475, 0.0, %s479
          %s481 = scalar_select %p461, 0.0, %s466
          %v482 = vld [vmem:[%s328] sm:$0xff]
          %483 = vadd.xlane.f32.xlu0 %v482
          %v484 = vpop.xlane.xlu0 %483
          %v485 = vrot.slane %v484, 4
          %v486 = vadd.f32 %v484, %v485
          %v487 = vrot.slane %v486, 2
          %v488 = vadd.f32 %v486, %v487
          %v489 = vrot.slane %v488, 1
          %v490 = vadd.f32 %v488, %v489
          %s491 = vtos %v490
          %v492 = vld [vmem:[%s333] sm:$0xff]
          %493 = vadd.xlane.f32.xlu0 %v492
          %v494 = vpop.xlane.xlu0 %493
          %v495 = vrot.slane %v494, 4
          %v496 = vadd.f32 %v494, %v495
          %v497 = vrot.slane %v496, 2
          %v498 = vadd.f32 %v496, %v497
          %v499 = vrot.slane %v498, 1
          %v500 = vadd.f32 %v498, %v499
          %s501 = vtos %v500
          %v502 = vld [vmem:[%s339] sm:$0xff]
          %503 = vadd.xlane.f32.xlu0 %v502
          %v504 = vpop.xlane.xlu0 %503
          %v505 = vrot.slane %v504, 4
          %v506 = vadd.f32 %v504, %v505
          %v507 = vrot.slane %v506, 2
          %v508 = vadd.f32 %v506, %v507
          %v509 = vrot.slane %v508, 1
          %v510 = vadd.f32 %v508, %v509
          %s511 = vtos %v510
          %p512 = scmp.eq.f32.partialorder %s491, 0.0
          %s513 = scalar_select %p512, 1.0, %s491
          %v514 = vstv %s513
          %v515 = vrcp.pop %v514
          %s516 = vtos %v515
          %s517 = smul.f32 %s501, %s516
          %v518 = vstv %s513
          %v519 = vrcp.pop %v518
          %s520 = vtos %v519
          %s521 = smul.f32 %s511, %s520
          %s522 = smul.f32 %s517, %s517
          %s523 = ssub.f32 %s521, %s522
          %p524 = scmp.eq.f32.partialorder %s523, 0.0
          %s525 = scalar_select %p524, 1.0, %s523
          %p526 = por %p512, %p524
          %v527 = vstv %s525
          %v528 = vrcp.pop %v527
          %s529 = vtos %v528
          %s530 = smul.f32 %s522, %s529
          %s531 = scalar_select %p526, 0.0, %s530
          %s532 = scalar_select %p512, 0.0, %s517
          %s533 = ssub.f32 %s480, %s531
          %s534 = smul.f32 %s533, %s533
          %s535 = smul.f32 %s534, 0.95
          %s536 = ssub.f32 %s481, %s532
          %s537 = smul.f32 %s536, %s536
          %s538 = smul.f32 %s537, 0.05
          %s539 = sadd.f32 %s535, %s538
          %s540 = sadd.f32 %s539, 0.0
          %v541 = vld [vmem:[%s349] sm:$0xff]
          %542 = vadd.xlane.f32.xlu0 %v541
          %v543 = vpop.xlane.xlu0 %542
          %v544 = vrot.slane %v543, 4
          %v545 = vadd.f32 %v543, %v544
          %v546 = vrot.slane %v545, 2
          %v547 = vadd.f32 %v545, %v546
          %v548 = vrot.slane %v547, 1
          %v549 = vadd.f32 %v547, %v548
          %s550 = vtos %v549
          %v551 = vld [vmem:[%s354] sm:$0xff]
          %552 = vadd.xlane.f32.xlu0 %v551
          %v553 = vpop.xlane.xlu0 %552
          %v554 = vrot.slane %v553, 4
          %v555 = vadd.f32 %v553, %v554
          %v556 = vrot.slane %v555, 2
          %v557 = vadd.f32 %v555, %v556
          %v558 = vrot.slane %v557, 1
          %v559 = vadd.f32 %v557, %v558
          %s560 = vtos %v559
          %v561 = vld [vmem:[%s360] sm:$0xff]
          %562 = vadd.xlane.f32.xlu0 %v561
          %v563 = vpop.xlane.xlu0 %562
          %v564 = vrot.slane %v563, 4
          %v565 = vadd.f32 %v563, %v564
          %v566 = vrot.slane %v565, 2
          %v567 = vadd.f32 %v565, %v566
          %v568 = vrot.slane %v567, 1
          %v569 = vadd.f32 %v567, %v568
          %s570 = vtos %v569
          %p571 = scmp.eq.f32.partialorder %s550, 0.0
          %s572 = scalar_select %p571, 1.0, %s550
          %v573 = vstv %s572
          %v574 = vrcp.pop %v573
          %s575 = vtos %v574
          %s576 = smul.f32 %s560, %s575
          %v577 = vstv %s572
          %v578 = vrcp.pop %v577
          %s579 = vtos %v578
          %s580 = smul.f32 %s570, %s579
          %s581 = smul.f32 %s576, %s576
          %s582 = ssub.f32 %s580, %s581
          %p583 = scmp.eq.f32.partialorder %s582, 0.0
          %s584 = scalar_select %p583, 1.0, %s582
          %p585 = por %p571, %p583
          %v586 = vstv %s584
          %v587 = vrcp.pop %v586
          %s588 = vtos %v587
          %s589 = smul.f32 %s581, %s588
          %s590 = scalar_select %p585, 0.0, %s589
          %s591 = scalar_select %p571, 0.0, %s576
          %v592 = vld [vmem:[%s369] sm:$0xff]
          %593 = vadd.xlane.f32.xlu0 %v592
          %v594 = vpop.xlane.xlu0 %593
          %v595 = vrot.slane %v594, 4
          %v596 = vadd.f32 %v594, %v595
          %v597 = vrot.slane %v596, 2
          %v598 = vadd.f32 %v596, %v597
          %v599 = vrot.slane %v598, 1
          %v600 = vadd.f32 %v598, %v599
          %s601 = vtos %v600
          %v602 = vld [vmem:[%s374] sm:$0xff]
          %603 = vadd.xlane.f32.xlu0 %v602
          %v604 = vpop.xlane.xlu0 %603
          %v605 = vrot.slane %v604, 4
          %v606 = vadd.f32 %v604, %v605
          %v607 = vrot.slane %v606, 2
          %v608 = vadd.f32 %v606, %v607
          %v609 = vrot.slane %v608, 1
          %v610 = vadd.f32 %v608, %v609
          %s611 = vtos %v610
          %v612 = vld [vmem:[%s380] sm:$0xff]
          %613 = vadd.xlane.f32.xlu0 %v612
          %v614 = vpop.xlane.xlu0 %613
          %v615 = vrot.slane %v614, 4
          %v616 = vadd.f32 %v614, %v615
          %v617 = vrot.slane %v616, 2
          %v618 = vadd.f32 %v616, %v617
          %v619 = vrot.slane %v618, 1
          %v620 = vadd.f32 %v618, %v619
          %s621 = vtos %v620
          %p622 = scmp.eq.f32.partialorder %s601, 0.0
          %s623 = scalar_select %p622, 1.0, %s601
          %v624 = vstv %s623
          %v625 = vrcp.pop %v624
          %s626 = vtos %v625
          %s627 = smul.f32 %s611, %s626
          %v628 = vstv %s623
          %v629 = vrcp.pop %v628
          %s630 = vtos %v629
          %s631 = smul.f32 %s621, %s630
          %s632 = smul.f32 %s627, %s627
          %s633 = ssub.f32 %s631, %s632
          %p634 = scmp.eq.f32.partialorder %s633, 0.0
          %s635 = scalar_select %p634, 1.0, %s633
          %p636 = por %p622, %p634
          %v637 = vstv %s635
          %v638 = vrcp.pop %v637
          %s639 = vtos %v638
          %s640 = smul.f32 %s632, %s639
          %s641 = scalar_select %p636, 0.0, %s640
          %s642 = scalar_select %p622, 0.0, %s627
          %s643 = ssub.f32 %s590, %s641
          %s644 = smul.f32 %s643, %s643
          %s645 = smul.f32 %s644, 0.95
          %s646 = ssub.f32 %s591, %s642
          %s647 = smul.f32 %s646, %s646
          %s648 = smul.f32 %s647, 0.05
          %s649 = sadd.f32 %s645, %s648
          %s650 = sadd.f32 %s540, %s649
          %v651 = vld [vmem:[%s390] sm:$0xff]
          %652 = vadd.xlane.f32.xlu0 %v651
          %v653 = vpop.xlane.xlu0 %652
          %v654 = vrot.slane %v653, 4
          %v655 = vadd.f32 %v653, %v654
          %v656 = vrot.slane %v655, 2
          %v657 = vadd.f32 %v655, %v656
          %v658 = vrot.slane %v657, 1
          %v659 = vadd.f32 %v657, %v658
          %s660 = vtos %v659
          %v661 = vld [vmem:[%s395] sm:$0xff]
          %662 = vadd.xlane.f32.xlu0 %v661
          %v663 = vpop.xlane.xlu0 %662
          %v664 = vrot.slane %v663, 4
          %v665 = vadd.f32 %v663, %v664
          %v666 = vrot.slane %v665, 2
          %v667 = vadd.f32 %v665, %v666
          %v668 = vrot.slane %v667, 1
          %v669 = vadd.f32 %v667, %v668
          %s670 = vtos %v669
          %v671 = vld [vmem:[%s401] sm:$0xff]
          %672 = vadd.xlane.f32.xlu0 %v671
          %v673 = vpop.xlane.xlu0 %672
          %v674 = vrot.slane %v673, 4
          %v675 = vadd.f32 %v673, %v674
          %v676 = vrot.slane %v675, 2
          %v677 = vadd.f32 %v675, %v676
          %v678 = vrot.slane %v677, 1
          %v679 = vadd.f32 %v677, %v678
          %s680 = vtos %v679
          %p681 = scmp.eq.f32.partialorder %s660, 0.0
          %s682 = scalar_select %p681, 1.0, %s660
          %v683 = vstv %s682
          %v684 = vrcp.pop %v683
          %s685 = vtos %v684
          %s686 = smul.f32 %s670, %s685
          %v687 = vstv %s682
          %v688 = vrcp.pop %v687
          %s689 = vtos %v688
          %s690 = smul.f32 %s680, %s689
          %s691 = smul.f32 %s686, %s686
          %s692 = ssub.f32 %s690, %s691
          %p693 = scmp.eq.f32.partialorder %s692, 0.0
          %s694 = scalar_select %p693, 1.0, %s692
          %p695 = por %p681, %p693
          %v696 = vstv %s694
          %v697 = vrcp.pop %v696
          %s698 = vtos %v697
          %s699 = smul.f32 %s691, %s698
          %s700 = scalar_select %p695, 0.0, %s699
          %s701 = scalar_select %p681, 0.0, %s686
          %v702 = vld [vmem:[%s410] sm:$0xff]
          %703 = vadd.xlane.f32.xlu0 %v702
          %v704 = vpop.xlane.xlu0 %703
          %v705 = vrot.slane %v704, 4
          %v706 = vadd.f32 %v704, %v705
          %v707 = vrot.slane %v706, 2
          %v708 = vadd.f32 %v706, %v707
          %v709 = vrot.slane %v708, 1
          %v710 = vadd.f32 %v708, %v709
          %s711 = vtos %v710
          %v712 = vld [vmem:[%s415] sm:$0xff]
          %713 = vadd.xlane.f32.xlu0 %v712
          %v714 = vpop.xlane.xlu0 %713
          %v715 = vrot.slane %v714, 4
          %v716 = vadd.f32 %v714, %v715
          %v717 = vrot.slane %v716, 2
          %v718 = vadd.f32 %v716, %v717
          %v719 = vrot.slane %v718, 1
          %v720 = vadd.f32 %v718, %v719
          %s721 = vtos %v720
          %v722 = vld [vmem:[%s421] sm:$0xff]
          %723 = vadd.xlane.f32.xlu0 %v722
          %v724 = vpop.xlane.xlu0 %723
          %v725 = vrot.slane %v724, 4
          %v726 = vadd.f32 %v724, %v725
          %v727 = vrot.slane %v726, 2
          %v728 = vadd.f32 %v726, %v727
          %v729 = vrot.slane %v728, 1
          %v730 = vadd.f32 %v728, %v729
          %s731 = vtos %v730
          %p732 = scmp.eq.f32.partialorder %s711, 0.0
          %s733 = scalar_select %p732, 1.0, %s711
          %v734 = vstv %s733
          %v735 = vrcp.pop %v734
          %s736 = vtos %v735
          %s737 = smul.f32 %s721, %s736
          %v738 = vstv %s733
          %v739 = vrcp.pop %v738
          %s740 = vtos %v739
          %s741 = smul.f32 %s731, %s740
          %s742 = smul.f32 %s737, %s737
          %s743 = ssub.f32 %s741, %s742
          %p744 = scmp.eq.f32.partialorder %s743, 0.0
          %s745 = scalar_select %p744, 1.0, %s743
          %p746 = por %p732, %p744
          %v747 = vstv %s745
          %v748 = vrcp.pop %v747
          %s749 = vtos %v748
          %s750 = smul.f32 %s742, %s749
          %s751 = scalar_select %p746, 0.0, %s750
          %s752 = scalar_select %p732, 0.0, %s737
          %s753 = ssub.f32 %s700, %s751
          %s754 = smul.f32 %s753, %s753
          %s755 = smul.f32 %s754, 0.95
          %s756 = ssub.f32 %s701, %s752
          %s757 = smul.f32 %s756, %s756
          %s758 = smul.f32 %s757, 0.05
          %s759 = sadd.f32 %s755, %s758
          %s760 = sadd.f32 %s650, %s759
          %v761 = vstv %s760
          %762 = vst [vmem:[%s280] sm:$0xff] %v761
        $region52: #{tpu_custom_call.1} parent=31 // pred_fallthru
          _
        %s763 = sand.u32 %s127, 1
        %s764 = scalar_lea.sflag [#allocation5], %s763
        %s765 = sand.u32 %s127, 1
        %s766 = smul.addr %s765, 8
        %s767 = scalar_lea.vmem [#allocation9], %s766
        // Predicated region
        $region53: #{tpu_custom_call.1} parent=31 // pred_check
          %p768 = pneg %p137
        $region54: #{tpu_custom_call.1} parent=31 // pred_check_branch
          %770 = sbr.rel (%p768) target = $region56
        $region55: #{tpu_custom_call.1} parent=31 // pred_region
          %s772 = ssub.s32 128, 128
          %773 = vsyncadd %s764, %s772
          %s774 = smul.addr %s27, 128
          %s775 = scalar_lea.hbm %s3, %s774
          %s777 = sshll.u32 %s767, 4
          %s778 = int_to_ptr.vmem [resolvable:$true] %s777
          %780 = dma.vmem_to_hbm [thread:$0]  %s778, 128, %s775, %s764
        $region56: #{tpu_custom_call.1} parent=31 // pred_fallthru
          _
      $region32: #{tpu_custom_call.1} parent=5 // pred_fallthru
        _
      %p781 = scmp.le.s32.totalorder 2, %s18
      // Predicated region
      $region57: #{tpu_custom_call.1} parent=5 // pred_check
        %p782 = pneg %p781
      $region58: #{tpu_custom_call.1} parent=5 // pred_check_branch
        %784 = sbr.rel (%p782) target = $region60
      $region59: #{tpu_custom_call.1} parent=5 // pred_region
        %s785 = ssub.s32 %s18, 2
        // Predicated region
        $region61: #{tpu_custom_call.1} parent=59 // pred_check
          %p786 = pneg %p143
        $region62: #{tpu_custom_call.1} parent=59 // pred_check_branch
          %788 = sbr.rel (%p786) target = $region64
        $region63: #{tpu_custom_call.1} parent=59 // pred_region
          %s789 = sand.u32 %s128, 1
          %s790 = scalar_lea.sflag [#allocation5], %s789
          %s791 = sand.u32 %s128, 1
          %s792 = smul.addr %s791, 8
          %s793 = scalar_lea.vmem [#allocation9], %s792
          %794 = dma.done %s790, 128
        $region64: #{tpu_custom_call.1} parent=59 // pred_fallthru
          _
      $region60: #{tpu_custom_call.1} parent=5 // pred_fallthru
        _
    $region6: #{tpu_custom_call.1} parent=1 // loop_footer
      %s22 = sadd.s32 1, %s18
    $region7: #{tpu_custom_call.1} parent=1 // loop_footer_branch
      %17 = sbr.rel target = $region3
    $region8: #{tpu_custom_call.1} parent=1 // loop_exit
      _
    %795 = vsyncpa [#allocation4], 1
    %s796 = scalar_lea.sflag [#allocation4], 1
    %797 = vsyncpa %s796, 1
    %798 = vsyncpa [#allocation7], 1
    %s799 = scalar_lea.sflag [#allocation7], 1
    %800 = vsyncpa %s799, 1
    %801 = vsyncpa [#allocation5], 1
    %s802 = scalar_lea.sflag [#allocation5], 1
    %803 = vsyncpa %s802, 1

</llo_original>
